<compile_context>
chip_gen: v6e
topology: v6e:2x2x1
jax: 0.10.0
libtpu: 0.0.40
codegen_flags: <defaults>
</compile_context>

<pallas_src>
import functools

import numpy as np
import jax
import jax.numpy as jnp
from jax.experimental import pallas as pl
from jax.experimental.pallas import tpu as pltpu

F32 = jnp.float32
BF16 = jnp.bfloat16

_LANE = 128   # lane width: every activation / weight column block is 128-aligned
_ROWS = 128   # uniform padded contraction dim (all logical K here are <= 128)


def _round_up(v, m):
    return ((v + m - 1) // m) * m


# --------------------------------------------------------------------------
# The single fused Pallas kernel
# --------------------------------------------------------------------------
def _deepfake_fused_kernel(x_ref, w_ref, b_ref, out_ref, *,
                           layout, bias_rows, lora_scale):
    L = _LANE
    ball = b_ref[...]                                   # (nbias, 128) f32, one load

    def w(name):                                        # static, lane-aligned view
        off, width = layout[name]
        return w_ref[:, off:off + width]                # bf16 (128, width)

    def b(name):
        r = bias_rows[name]
        return ball[r:r + 1, :]                         # (1, 128) f32, broadcasts

    def mm(a, name):                                    # bf16 MXU, f32 accumulate
        return jnp.dot(a.astype(BF16), w(name),
                       preferred_element_type=jnp.float32)

    x = x_ref[...]                                      # (tb, 128) f32, zero-padded

    # --- one x-driven GEMM: [npr_re | npr_im | vis_wT | lora_aT] -----------
    y = mm(x, "xall")                                   # (tb, 512)
    re, im = y[:, 0:L], y[:, L:2 * L]
    vis_pre, lora_mid = y[:, 2 * L:3 * L], y[:, 3 * L:4 * L]

    # combined NPR = |npr + rfft2(npr)|  (interp + DFT folded into npr_re/im)
    a = jnp.sqrt(re * re + im * im)

    # --- ResNet(BasicBlock, [2, 2]) stem: conv1+bn+relu, maxpool 3x3 s2 p1 --
    a = jnp.maximum(mm(a, "c1") + b("c1"), 0.0)         # BN scale folded into c1
    pm = mm(a, "pool")                                  # 3 gathers in one GEMM
    a = jnp.maximum(jnp.maximum(pm[:, 0:L], pm[:, L:2 * L]), pm[:, 2 * L:3 * L])

    def basic_block(a, tag):                            # no-downsample BasicBlock
        z = jnp.maximum(mm(a, tag + "a") + b(tag + "a"), 0.0)
        z = mm(z, tag + "b") + b(tag + "b")
        return jnp.maximum(z + a, 0.0)                  # residual add + relu

    a = basic_block(a, "l1b1")
    a = basic_block(a, "l1b2")

    # layer2 block1: strided conv1 and 1x1 downsample share one GEMM
    yd = mm(a, "l2b1ad")                                # (tb, 256)
    ym = jnp.maximum(yd[:, 0:L] + b("l2b1a"), 0.0)
    idn = yd[:, L:2 * L] + b("l2b1d")
    ym = mm(ym, "l2b1b") + b("l2b1b")
    a = jnp.maximum(ym + idn, 0.0)

    a = basic_block(a, "l2b2")

    npr_feat = mm(a, "avg")                             # global avg pool (logical 32)

    # --- Vision stand-in (LoRA linear, eval) + fc2 (Linear, ReLU, Dropout=id)
    vis = vis_pre + b("vis") + lora_scale * mm(lora_mid, "lora_b")
    orig = jnp.maximum(mm(vis, "fc2") + b("fc2"), 0.0)

    # --- Fusion + fc1 head (fusion_logits; npr/lora logits are dead code). --
    out_ref[...] = mm(orig + npr_feat, "fc1") + b("fc1")   # lane-dense (tb, 128)


def deepfake_classifier_forward(pixel_values, kparams, lora_rank=8,
                                lora_alpha=28, batch_block=256):
    b_in = pixel_values.shape[0]
    x = pixel_values.reshape(b_in, -1).astype(F32)
    n = x.shape[1]
    assert n == kparams["n_in"] and n <= _LANE

    batch_block = _round_up(batch_block, 8)
    tb = min(batch_block, _round_up(b_in, 8))           # MXU-sized batch tile
    bp = _round_up(b_in, tb)
    xp = jnp.pad(x, ((0, bp - b_in), (0, _LANE - n)))   # sublane/lane padded LHS

    wslab, bslab = kparams["wslab"], kparams["bslab"]
    out = pl.pallas_call(
        functools.partial(_deepfake_fused_kernel,
                          layout=kparams["layout"],
                          bias_rows=kparams["bias_rows"],
                          lora_scale=float(lora_alpha) / float(lora_rank)),
        out_shape=jax.ShapeDtypeStruct((bp, _LANE), F32),
        grid_spec=pltpu.PrefetchScalarGridSpec(
            num_scalar_prefetch=0,
            grid=(bp // tb,),
            in_specs=[
                pl.BlockSpec((tb, _LANE), lambda i: (i, 0)),
                pl.BlockSpec(wslab.shape, lambda i: (0, 0)),   # weights stay resident
                pl.BlockSpec(bslab.shape, lambda i: (0, 0)),
            ],
            out_specs=pl.BlockSpec((tb, _LANE), lambda i: (i, 0))),
        compiler_params=pltpu.CompilerParams(
            dimension_semantics=("parallel",)),
    )(xp, wslab, bslab)
    return out[:b_in, :2]


# --------------------------------------------------------------------------
# Host-side (init-time) folding of convs / BN / pooling / interp / DFT into
# constant matrices, packed into two pre-padded slabs.
# Flattening convention everywhere: (c*H + h)*W + w.
# --------------------------------------------------------------------------
def _conv_dense(w, ih, iw, stride, pad):
    """Dense D s.t. flat_out = flat_in @ D (conv is linear in its input)."""
    w = np.asarray(w, np.float32)
    oc, ic, kh, kw = w.shape
    oh = (ih + 2 * pad - kh) // stride + 1
    ow = (iw + 2 * pad - kw) // stride + 1
    d = np.zeros((ic * ih * iw, oc * oh * ow), np.float32)
    for o in range(oc):
        for y in range(oh):
            for xo in range(ow):
                col = (o * oh + y) * ow + xo
                for i in range(ic):
                    for ky in range(kh):
                        for kx in range(kw):
                            yy = y * stride + ky - pad
                            xx = xo * stride + kx - pad
                            if 0 <= yy < ih and 0 <= xx < iw:
                                d[(i * ih + yy) * iw + xx, col] = w[o, i, ky, kx]
    return d, oh, ow


def _fold_conv_bn(w, bn, ih, iw, stride, pad):
    """Dense conv matrix with BN scale folded in; shift kept as f32 epilogue."""
    d, oh, ow = _conv_dense(w, ih, iw, stride, pad)
    gamma, beta, mean, var = (np.asarray(t, np.float32) for t in bn)
    scale = gamma / np.sqrt(var + 1e-5)
    shift = beta - mean * scale
    d = d * np.repeat(scale, oh * ow)[None, :]
    return d, np.repeat(shift, oh * ow), oh, ow


def _maxpool_gathers(ch, ih):
    """3x3 / stride 2 / pad 1 maxpool on (ch, ih, 1) as 3 column gathers.

    Valid because the pooled activations are post-ReLU (>= 0), so the implicit
    zero padding of the gather matmuls matches -inf padding of true maxpool.
    """
    oh = (ih + 2 - 3) // 2 + 1
    mats = []
    for d in (-1, 0, 1):
        g = np.zeros((ch * ih, ch * oh), np.float32)
        for c in range(ch):
            for yo in range(oh):
                yi = 2 * yo + d
                if 0 <= yi < ih:
                    g[c * ih + yi, c * oh + yo] = 1.0
        mats.append(g)
    return mats, oh


def _avgpool_matrix(ch, spatial):
    a = np.zeros((ch * spatial, ch), np.float32)
    for c in range(ch):
        for s in range(spatial):
            a[c * spatial + s, c] = 1.0 / spatial
    return a


def _npr_matrices(C, H, W):
    """Fold interp-residual + rfft2 into two (C*H*W, C*H*W) matrices.

    Row-vector convention:  x_flat @ npr_re = npr + Re(rfft2(npr))
                            x_flat @ npr_im = Im(rfft2(npr))
    with npr = x - interp(x) (rfft2(x) - rfft2(interp) == rfft2(npr) by
    linearity of the DFT).
    """
    wf = W // 2 + 1
    assert wf == W, "reference broadcast (npr + rfft2 diff) requires W == 2"
    n = C * H * W
    # Nearest down(0.5) + up(2) interpolation as a selection matrix (col-vec).
    P = np.zeros((n, n), np.float64)
    for c in range(C):
        for h in range(H):
            for w in range(W):
                P[(c * H + h) * W + w,
                  (c * H + 2 * (h // 2)) * W + 2 * (w // 2)] = 1.0
    # 2-D DFT: full FFT over H, real FFT over W (wf == W here).
    Mr = np.zeros((n, n), np.float64)
    Mi = np.zeros((n, n), np.float64)
    for c in range(C):
        for kh in range(H):
            for kw in range(wf):
                ro = (c * H + kh) * wf + kw
                for h in range(H):
                    for w in range(W):
                        ang = 2.0 * np.pi * (kh * h / H + kw * w / W)
                        Mr[ro, (c * H + h) * W + w] = np.cos(ang)
                        Mi[ro, (c * H + h) * W + w] = -np.sin(ang)
    eye = np.eye(n)
    npr_re = ((eye + Mr) @ (eye - P)).T.astype(np.float32)
    npr_im = (Mi @ (eye - P)).T.astype(np.float32)
    return npr_re, npr_im


class _WeightSlab:
    """bf16 weight slab (128, total_cols); each matrix at a 128-aligned offset."""

    def __init__(self):
        self._mats, self._off, self.layout = [], 0, {}

    def add(self, name, mat):
        mat = np.asarray(mat, np.float32)
        r, c = mat.shape
        assert r <= _ROWS
        cp = _round_up(c, _LANE)
        buf = np.zeros((_ROWS, cp), np.float32)
        buf[:r, :c] = mat
        self.layout[name] = (self._off, cp)
        self._off += cp
        self._mats.append(buf)

    def finish(self):
        return np.concatenate(self._mats, axis=1)


class _BiasSlab:
    """f32 bias slab (nbias_pad, 128); one padded row per epilogue shift."""

    def __init__(self):
        self._rows, self.rows = [], {}

    def add(self, name, vec):
        vec = np.asarray(vec, np.float32).ravel()
        assert vec.size <= _LANE
        buf = np.zeros((_LANE,), np.float32)
        buf[:vec.size] = vec
        self.rows[name] = len(self._rows)
        self._rows.append(buf)

    def finish(self):
        n = len(self._rows)
        slab = np.zeros((_round_up(n, 8), _LANE), np.float32)
        slab[:n] = np.stack(self._rows)
        return slab


def build_kernel_params(resnet_p, cls_p, C, H, W):
    """Fold conv/BN/pool/interp/DFT into constants ONCE and pack into 2 slabs."""
    n_in = C * H * W
    assert n_in <= _ROWS
    wb, bb = _WeightSlab(), _BiasSlab()

    # x-driven fused GEMM: [npr_re | npr_im | vis_wT | lora_aT] (128-aligned).
    npr_re, npr_im = _npr_matrices(C, H, W)
    vis_wT = np.asarray(cls_p["vis_w"], np.float32).T
    lora_aT = np.asarray(cls_p["lora_a"], np.float32).T
    vdim, r = vis_wT.shape[1], lora_aT.shape[1]
    assert vdim <= _LANE and r <= _LANE
    xall = np.zeros((n_in, 4 * _LANE), np.float32)
    xall[:, 0:n_in] = npr_re
    xall[:, _LANE:_LANE + n_in] = npr_im
    xall[:, 2 * _LANE:2 * _LANE + vdim] = vis_wT
    xall[:, 3 * _LANE:3 * _LANE + r] = lora_aT
    wb.add("xall", xall)

    # Stem: conv1 7x7 s2 p3 + bn (scale folded) + relu, then maxpool 3x3 s2 p1.
    d, shift, oh, ow = _fold_conv_bn(resnet_p["conv1_w"], resnet_p["bn1"], H, W, 2, 3)
    assert ow == 1, "tiny-config folding assumes width collapses to 1 after conv1"
    wb.add("c1", d)
    bb.add("c1", shift)
    ch0 = resnet_p["conv1_w"].shape[0]
    (gm, gc, gp), oh = _maxpool_gathers(ch0, oh)
    pc = gm.shape[1]
    pool = np.zeros((gm.shape[0], 3 * _LANE), np.float32)
    pool[:, 0:pc] = gm
    pool[:, _LANE:_LANE + pc] = gc
    pool[:, 2 * _LANE:2 * _LANE + pc] = gp
    wb.add("pool", pool)

    def add_plain_block(tag, bp, ih, iw):
        d1, s1, boh, bow = _fold_conv_bn(bp["conv1_w"], bp["bn1"], ih, iw, 1, 1)
        d2, s2, _, _ = _fold_conv_bn(bp["conv2_w"], bp["bn2"], boh, bow, 1, 1)
        wb.add(tag + "a", d1); bb.add(tag + "a", s1)
        wb.add(tag + "b", d2); bb.add(tag + "b", s2)
        return boh, bow

    ih, iw = oh, 1
    ih, iw = add_plain_block("l1b1", resnet_p["layer1"][0], ih, iw)
    ih, iw = add_plain_block("l1b2", resnet_p["layer1"][1], ih, iw)

    # layer2 block1: strided conv1 and 1x1 downsample fused into one GEMM.
    bp = resnet_p["layer2"][0]
    d1, s1, boh, bow = _fold_conv_bn(bp["conv1_w"], bp["bn1"], ih, iw, 2, 1)
    dd, sd, doh, dow = _fold_conv_bn(bp["down_w"], bp["down_bn"], ih, iw, 2, 0)
    assert (boh, bow) == (doh, dow)
    ncol = d1.shape[1]
    assert ncol <= _LANE and dd.shape[1] == ncol
    ad = np.zeros((d1.shape[0], 2 * _LANE), np.float32)
    ad[:, 0:ncol] = d1
    ad[:, _LANE:_LANE + ncol] = dd
    wb.add("l2b1ad", ad); bb.add("l2b1a", s1); bb.add("l2b1d", sd)
    d2, s2, _, _ = _fold_conv_bn(bp["conv2_w"], bp["bn2"], boh, bow, 1, 1)
    wb.add("l2b1b", d2); bb.add("l2b1b", s2)
    ih, iw = boh, bow

    ih, iw = add_plain_block("l2b2", resnet_p["layer2"][1], ih, iw)

    ch1 = resnet_p["layer2"][1]["conv2_w"].shape[0]
    wb.add("avg", _avgpool_matrix(ch1, ih * iw))         # entries 1/spatial = 0.5

    # Classifier / LoRA weights (pre-transposed once).
    bb.add("vis", cls_p["vis_b"])
    wb.add("lora_b", np.asarray(cls_p["lora_b"], np.float32).T)
    wb.add("fc2", np.asarray(cls_p["fc2_w"], np.float32).T); bb.add("fc2", cls_p["fc2_b"])
    wb.add("fc1", np.asarray(cls_p["fc1_w"], np.float32).T); bb.add("fc1", cls_p["fc1_b"])

    return {
        "wslab": jnp.asarray(wb.finish(), BF16),          # single bf16 weight slab
        "bslab": jnp.asarray(bb.finish(), F32),           # single f32 shift/bias slab
        "layout": wb.layout,
        "bias_rows": bb.rows,
        "n_in": n_in,
    }


# --------------------------------------------------------------------------
# Deterministic parameter construction
# --------------------------------------------------------------------------
class KeyGen:
    def __init__(self, key):
        self.key = key

    def __call__(self):
        self.key, sub = jax.random.split(self.key)
        return sub


def _make_bn(kg, c):
    return (1.0 + 0.1 * jax.random.normal(kg(), (c,)),
            0.1 * jax.random.normal(kg(), (c,)),
            0.1 * jax.random.normal(kg(), (c,)),
            0.5 + 0.5 * jnp.abs(jax.random.normal(kg(), (c,))))


def _make_conv(kg, oc, ic, k):
    return jax.random.normal(kg(), (oc, ic, k, k)) / np.sqrt(ic * k * k)


def init_resnet(kg, in_ch=3, widths=(16, 32)):
    p = {"conv1_w": _make_conv(kg, widths[0], in_ch, 7),
         "bn1": _make_bn(kg, widths[0])}

    def block(in_c, out_c, stride):
        bp = {"conv1_w": _make_conv(kg, out_c, in_c, 3), "bn1": _make_bn(kg, out_c),
              "conv2_w": _make_conv(kg, out_c, out_c, 3), "bn2": _make_bn(kg, out_c)}
        if stride != 1 or in_c != out_c:
            bp["down_w"] = _make_conv(kg, out_c, in_c, 1)
            bp["down_bn"] = _make_bn(kg, out_c)
        return bp

    p["layer1"] = [block(widths[0], widths[0], 1), block(widths[0], widths[0], 1)]
    p["layer2"] = [block(widths[0], widths[1], 2), block(widths[1], widths[1], 1)]
    return p


def init_classifier(kg, in_dim, vis_dim, npr_dim, r=8):
    return {
        "vis_w": jax.random.normal(kg(), (vis_dim, in_dim)) / np.sqrt(in_dim),
        "vis_b": 0.1 * jax.random.normal(kg(), (vis_dim,)),
        "lora_a": jax.random.normal(kg(), (r, in_dim)) / np.sqrt(in_dim),
        "lora_b": 0.01 * jax.random.normal(kg(), (vis_dim, r)),
        "fc2_w": jax.random.normal(kg(), (npr_dim, vis_dim)) / np.sqrt(vis_dim),
        "fc2_b": 0.1 * jax.random.normal(kg(), (npr_dim,)),
        "fc1_w": jax.random.normal(kg(), (2, npr_dim)) / np.sqrt(npr_dim),
        "fc1_b": 0.1 * jax.random.normal(kg(), (2,)),
    }


if __name__ == "__main__":
    kg = KeyGen(jax.random.PRNGKey(0))
    # W=2 so that W//2+1 == W, matching the reference's npr+freq_diff broadcast.
    B, C, H, W = 2, 3, 16, 2
    pixel_values = jax.random.normal(kg(), (B, C, H, W), dtype=F32)

    widths = (16, 32)                      # npr_feature_dim = 32
    vis_dim = 32                           # stand-in vision_feature_dim
    resnet_p = init_resnet(kg, in_ch=C, widths=widths)
    cls_p = init_classifier(kg, in_dim=C * H * W, vis_dim=vis_dim,
                            npr_dim=widths[1], r=8)

    # All conv/BN/pool/interp/DFT constants folded + packed once at init.
    kparams = build_kernel_params(resnet_p, cls_p, C, H, W)

    logits = deepfake_classifier_forward(pixel_values, kparams,
                                         lora_rank=8, lora_alpha=28)
    jax.block_until_ready(logits)
    assert logits.shape == (B, 2) and logits.dtype == jnp.float32
    assert bool(jnp.all(jnp.isfinite(logits)))
    print("KERNEL_OK")
</pallas_src>

<mosaic_0001>
module attributes {stable_mosaic.version = 11 : i64} {
  func.func @_deepfake_fused_kernel(%arg0: i32, %arg1: memref<8x128xf32, #tpu.memory_space<vmem>>, %arg2: memref<128x2688xbf16, #tpu.memory_space<vmem>>, %arg3: memref<16x128xf32, #tpu.memory_space<vmem>>, %arg4: memref<8x128xf32, #tpu.memory_space<vmem>>) attributes {dimension_semantics = [#tpu.dimension_semantics<parallel>], iteration_bounds = array<i64: 1>, scalar_prefetch = 0 : i64, scratch_operands = 0 : i64, tpu.core_type = #tpu.core_type<tc>, window_params = [{transform_indices = @transform_0, window_bounds = array<i64: 8, 128>}, {pipeline_mode = #tpu.pipeline_mode<synchronous>, transform_indices = @transform_1, window_bounds = array<i64: 128, 2688>}, {pipeline_mode = #tpu.pipeline_mode<synchronous>, transform_indices = @transform_2, window_bounds = array<i64: 16, 128>}, {transform_indices = @transform_3, window_bounds = array<i64: 8, 128>}]} {
    %c0 = arith.constant 0 : index
    %c0_0 = arith.constant 0 : index
    %0 = vector.load %arg3[%c0, %c0_0] : memref<16x128xf32, #tpu.memory_space<vmem>>, vector<16x128xf32>
    %c0_1 = arith.constant 0 : index
    %c0_2 = arith.constant 0 : index
    %1 = vector.load %arg1[%c0_1, %c0_2] : memref<8x128xf32, #tpu.memory_space<vmem>>, vector<8x128xf32>
    %2 = arith.truncf %1 : vector<8x128xf32> to vector<8x128xbf16>
    %c0_3 = arith.constant 0 : index
    %c0_4 = arith.constant 0 : index
    %3 = vector.load %arg2[%c0_3, %c0_4] : memref<128x2688xbf16, #tpu.memory_space<vmem>>, vector<128x512xbf16>
    %cst = arith.constant dense<0.000000e+00> : vector<8x512xf32>
    %4 = tpu.matmul %2, %3, %cst {dimension_numbers = #tpu.dot_dimension_numbers<[1], [0], [0], [1], [0, 0, 1, 1], [], []>} : vector<8x128xbf16>, vector<128x512xbf16>, vector<8x512xf32> -> vector<8x512xf32>
    %5 = vector.extract_strided_slice %4 {offsets = [0, 0], sizes = [8, 128], strides = [1, 1]} : vector<8x512xf32> to vector<8x128xf32>
    %6 = vector.extract_strided_slice %4 {offsets = [0, 128], sizes = [8, 128], strides = [1, 1]} : vector<8x512xf32> to vector<8x128xf32>
    %7 = vector.extract_strided_slice %4 {offsets = [0, 256], sizes = [8, 128], strides = [1, 1]} : vector<8x512xf32> to vector<8x128xf32>
    %8 = vector.extract_strided_slice %4 {offsets = [0, 384], sizes = [8, 128], strides = [1, 1]} : vector<8x512xf32> to vector<8x128xf32>
    %9 = arith.mulf %5, %5 : vector<8x128xf32>
    %10 = arith.mulf %6, %6 : vector<8x128xf32>
    %11 = arith.addf %9, %10 : vector<8x128xf32>
    %12 = math.sqrt %11 : vector<8x128xf32>
    %13 = arith.truncf %12 : vector<8x128xf32> to vector<8x128xbf16>
    %c0_5 = arith.constant 0 : index
    %c512 = arith.constant 512 : index
    %14 = vector.load %arg2[%c0_5, %c512] : memref<128x2688xbf16, #tpu.memory_space<vmem>>, vector<128x128xbf16>
    %cst_6 = arith.constant dense<0.000000e+00> : vector<8x128xf32>
    %15 = tpu.matmul %13, %14, %cst_6 {dimension_numbers = #tpu.dot_dimension_numbers<[1], [0], [0], [1], [0, 0, 1, 1], [], []>} : vector<8x128xbf16>, vector<128x128xbf16>, vector<8x128xf32> -> vector<8x128xf32>
    %16 = vector.extract_strided_slice %0 {offsets = [0, 0], sizes = [1, 128], strides = [1, 1]} : vector<16x128xf32> to vector<1x128xf32>
    %17 = vector.broadcast %16 : vector<1x128xf32> to vector<8x128xf32>
    %18 = arith.addf %15, %17 : vector<8x128xf32>
    %cst_7 = arith.constant 0.000000e+00 : f32
    %19 = vector.broadcast %cst_7 : f32 to vector<8x128xf32>
    %20 = arith.maximumf %18, %19 : vector<8x128xf32>
    %21 = arith.truncf %20 : vector<8x128xf32> to vector<8x128xbf16>
    %c0_8 = arith.constant 0 : index
    %c640 = arith.constant 640 : index
    %22 = vector.load %arg2[%c0_8, %c640] : memref<128x2688xbf16, #tpu.memory_space<vmem>>, vector<128x384xbf16>
    %cst_9 = arith.constant dense<0.000000e+00> : vector<8x384xf32>
    %23 = tpu.matmul %21, %22, %cst_9 {dimension_numbers = #tpu.dot_dimension_numbers<[1], [0], [0], [1], [0, 0, 1, 1], [], []>} : vector<8x128xbf16>, vector<128x384xbf16>, vector<8x384xf32> -> vector<8x384xf32>
    %24 = vector.extract_strided_slice %23 {offsets = [0, 0], sizes = [8, 128], strides = [1, 1]} : vector<8x384xf32> to vector<8x128xf32>
    %25 = vector.extract_strided_slice %23 {offsets = [0, 128], sizes = [8, 128], strides = [1, 1]} : vector<8x384xf32> to vector<8x128xf32>
    %26 = arith.maximumf %24, %25 : vector<8x128xf32>
    %27 = vector.extract_strided_slice %23 {offsets = [0, 256], sizes = [8, 128], strides = [1, 1]} : vector<8x384xf32> to vector<8x128xf32>
    %28 = arith.maximumf %26, %27 : vector<8x128xf32>
    %29 = arith.truncf %28 : vector<8x128xf32> to vector<8x128xbf16>
    %c0_10 = arith.constant 0 : index
    %c1024 = arith.constant 1024 : index
    %30 = vector.load %arg2[%c0_10, %c1024] : memref<128x2688xbf16, #tpu.memory_space<vmem>>, vector<128x128xbf16>
    %cst_11 = arith.constant dense<0.000000e+00> : vector<8x128xf32>
    %31 = tpu.matmul %29, %30, %cst_11 {dimension_numbers = #tpu.dot_dimension_numbers<[1], [0], [0], [1], [0, 0, 1, 1], [], []>} : vector<8x128xbf16>, vector<128x128xbf16>, vector<8x128xf32> -> vector<8x128xf32>
    %32 = vector.extract_strided_slice %0 {offsets = [1, 0], sizes = [1, 128], strides = [1, 1]} : vector<16x128xf32> to vector<1x128xf32>
    %33 = vector.broadcast %32 : vector<1x128xf32> to vector<8x128xf32>
    %34 = arith.addf %31, %33 : vector<8x128xf32>
    %cst_12 = arith.constant 0.000000e+00 : f32
    %35 = vector.broadcast %cst_12 : f32 to vector<8x128xf32>
    %36 = arith.maximumf %34, %35 : vector<8x128xf32>
    %37 = arith.truncf %36 : vector<8x128xf32> to vector<8x128xbf16>
    %c0_13 = arith.constant 0 : index
    %c1152 = arith.constant 1152 : index
    %38 = vector.load %arg2[%c0_13, %c1152] : memref<128x2688xbf16, #tpu.memory_space<vmem>>, vector<128x128xbf16>
    %cst_14 = arith.constant dense<0.000000e+00> : vector<8x128xf32>
    %39 = tpu.matmul %37, %38, %cst_14 {dimension_numbers = #tpu.dot_dimension_numbers<[1], [0], [0], [1], [0, 0, 1, 1], [], []>} : vector<8x128xbf16>, vector<128x128xbf16>, vector<8x128xf32> -> vector<8x128xf32>
    %40 = vector.extract_strided_slice %0 {offsets = [2, 0], sizes = [1, 128], strides = [1, 1]} : vector<16x128xf32> to vector<1x128xf32>
    %41 = vector.broadcast %40 : vector<1x128xf32> to vector<8x128xf32>
    %42 = arith.addf %39, %41 : vector<8x128xf32>
    %43 = arith.addf %42, %28 : vector<8x128xf32>
    %cst_15 = arith.constant 0.000000e+00 : f32
    %44 = vector.broadcast %cst_15 : f32 to vector<8x128xf32>
    %45 = arith.maximumf %43, %44 : vector<8x128xf32>
    %46 = arith.truncf %45 : vector<8x128xf32> to vector<8x128xbf16>
    %c0_16 = arith.constant 0 : index
    %c1280 = arith.constant 1280 : index
    %47 = vector.load %arg2[%c0_16, %c1280] : memref<128x2688xbf16, #tpu.memory_space<vmem>>, vector<128x128xbf16>
    %cst_17 = arith.constant dense<0.000000e+00> : vector<8x128xf32>
    %48 = tpu.matmul %46, %47, %cst_17 {dimension_numbers = #tpu.dot_dimension_numbers<[1], [0], [0], [1], [0, 0, 1, 1], [], []>} : vector<8x128xbf16>, vector<128x128xbf16>, vector<8x128xf32> -> vector<8x128xf32>
    %49 = vector.extract_strided_slice %0 {offsets = [3, 0], sizes = [1, 128], strides = [1, 1]} : vector<16x128xf32> to vector<1x128xf32>
    %50 = vector.broadcast %49 : vector<1x128xf32> to vector<8x128xf32>
    %51 = arith.addf %48, %50 : vector<8x128xf32>
    %cst_18 = arith.constant 0.000000e+00 : f32
    %52 = vector.broadcast %cst_18 : f32 to vector<8x128xf32>
    %53 = arith.maximumf %51, %52 : vector<8x128xf32>
    %54 = arith.truncf %53 : vector<8x128xf32> to vector<8x128xbf16>
    %c0_19 = arith.constant 0 : index
    %c1408 = arith.constant 1408 : index
    %55 = vector.load %arg2[%c0_19, %c1408] : memref<128x2688xbf16, #tpu.memory_space<vmem>>, vector<128x128xbf16>
    %cst_20 = arith.constant dense<0.000000e+00> : vector<8x128xf32>
    %56 = tpu.matmul %54, %55, %cst_20 {dimension_numbers = #tpu.dot_dimension_numbers<[1], [0], [0], [1], [0, 0, 1, 1], [], []>} : vector<8x128xbf16>, vector<128x128xbf16>, vector<8x128xf32> -> vector<8x128xf32>
    %57 = vector.extract_strided_slice %0 {offsets = [4, 0], sizes = [1, 128], strides = [1, 1]} : vector<16x128xf32> to vector<1x128xf32>
    %58 = vector.broadcast %57 : vector<1x128xf32> to vector<8x128xf32>
    %59 = arith.addf %56, %58 : vector<8x128xf32>
    %60 = arith.addf %59, %45 : vector<8x128xf32>
    %cst_21 = arith.constant 0.000000e+00 : f32
    %61 = vector.broadcast %cst_21 : f32 to vector<8x128xf32>
    %62 = arith.maximumf %60, %61 : vector<8x128xf32>
    %63 = arith.truncf %62 : vector<8x128xf32> to vector<8x128xbf16>
    %c0_22 = arith.constant 0 : index
    %c1536 = arith.constant 1536 : index
    %64 = vector.load %arg2[%c0_22, %c1536] : memref<128x2688xbf16, #tpu.memory_space<vmem>>, vector<128x256xbf16>
    %cst_23 = arith.constant dense<0.000000e+00> : vector<8x256xf32>
    %65 = tpu.matmul %63, %64, %cst_23 {dimension_numbers = #tpu.dot_dimension_numbers<[1], [0], [0], [1], [0, 0, 1, 1], [], []>} : vector<8x128xbf16>, vector<128x256xbf16>, vector<8x256xf32> -> vector<8x256xf32>
    %66 = vector.extract_strided_slice %65 {offsets = [0, 0], sizes = [8, 128], strides = [1, 1]} : vector<8x256xf32> to vector<8x128xf32>
    %67 = vector.extract_strided_slice %0 {offsets = [5, 0], sizes = [1, 128], strides = [1, 1]} : vector<16x128xf32> to vector<1x128xf32>
    %68 = vector.broadcast %67 : vector<1x128xf32> to vector<8x128xf32>
    %69 = arith.addf %66, %68 : vector<8x128xf32>
    %cst_24 = arith.constant 0.000000e+00 : f32
    %70 = vector.broadcast %cst_24 : f32 to vector<8x128xf32>
    %71 = arith.maximumf %69, %70 : vector<8x128xf32>
    %72 = vector.extract_strided_slice %65 {offsets = [0, 128], sizes = [8, 128], strides = [1, 1]} : vector<8x256xf32> to vector<8x128xf32>
    %73 = vector.extract_strided_slice %0 {offsets = [6, 0], sizes = [1, 128], strides = [1, 1]} : vector<16x128xf32> to vector<1x128xf32>
    %74 = vector.broadcast %73 : vector<1x128xf32> to vector<8x128xf32>
    %75 = arith.addf %72, %74 : vector<8x128xf32>
    %76 = arith.truncf %71 : vector<8x128xf32> to vector<8x128xbf16>
    %c0_25 = arith.constant 0 : index
    %c1792 = arith.constant 1792 : index
    %77 = vector.load %arg2[%c0_25, %c1792] : memref<128x2688xbf16, #tpu.memory_space<vmem>>, vector<128x128xbf16>
    %cst_26 = arith.constant dense<0.000000e+00> : vector<8x128xf32>
    %78 = tpu.matmul %76, %77, %cst_26 {dimension_numbers = #tpu.dot_dimension_numbers<[1], [0], [0], [1], [0, 0, 1, 1], [], []>} : vector<8x128xbf16>, vector<128x128xbf16>, vector<8x128xf32> -> vector<8x128xf32>
    %79 = vector.extract_strided_slice %0 {offsets = [7, 0], sizes = [1, 128], strides = [1, 1]} : vector<16x128xf32> to vector<1x128xf32>
    %80 = vector.broadcast %79 : vector<1x128xf32> to vector<8x128xf32>
    %81 = arith.addf %78, %80 : vector<8x128xf32>
    %82 = arith.addf %81, %75 : vector<8x128xf32>
    %cst_27 = arith.constant 0.000000e+00 : f32
    %83 = vector.broadcast %cst_27 : f32 to vector<8x128xf32>
    %84 = arith.maximumf %82, %83 : vector<8x128xf32>
    %85 = arith.truncf %84 : vector<8x128xf32> to vector<8x128xbf16>
    %c0_28 = arith.constant 0 : index
    %c1920 = arith.constant 1920 : index
    %86 = vector.load %arg2[%c0_28, %c1920] : memref<128x2688xbf16, #tpu.memory_space<vmem>>, vector<128x128xbf16>
    %cst_29 = arith.constant dense<0.000000e+00> : vector<8x128xf32>
    %87 = tpu.matmul %85, %86, %cst_29 {dimension_numbers = #tpu.dot_dimension_numbers<[1], [0], [0], [1], [0, 0, 1, 1], [], []>} : vector<8x128xbf16>, vector<128x128xbf16>, vector<8x128xf32> -> vector<8x128xf32>
    %88 = vector.extract_strided_slice %0 {offsets = [8, 0], sizes = [1, 128], strides = [1, 1]} : vector<16x128xf32> to vector<1x128xf32>
    %89 = vector.broadcast %88 : vector<1x128xf32> to vector<8x128xf32>
    %90 = arith.addf %87, %89 : vector<8x128xf32>
    %cst_30 = arith.constant 0.000000e+00 : f32
    %91 = vector.broadcast %cst_30 : f32 to vector<8x128xf32>
    %92 = arith.maximumf %90, %91 : vector<8x128xf32>
    %93 = arith.truncf %92 : vector<8x128xf32> to vector<8x128xbf16>
    %c0_31 = arith.constant 0 : index
    %c2048 = arith.constant 2048 : index
    %94 = vector.load %arg2[%c0_31, %c2048] : memref<128x2688xbf16, #tpu.memory_space<vmem>>, vector<128x128xbf16>
    %cst_32 = arith.constant dense<0.000000e+00> : vector<8x128xf32>
    %95 = tpu.matmul %93, %94, %cst_32 {dimension_numbers = #tpu.dot_dimension_numbers<[1], [0], [0], [1], [0, 0, 1, 1], [], []>} : vector<8x128xbf16>, vector<128x128xbf16>, vector<8x128xf32> -> vector<8x128xf32>
    %96 = vector.extract_strided_slice %0 {offsets = [9, 0], sizes = [1, 128], strides = [1, 1]} : vector<16x128xf32> to vector<1x128xf32>
    %97 = vector.broadcast %96 : vector<1x128xf32> to vector<8x128xf32>
    %98 = arith.addf %95, %97 : vector<8x128xf32>
    %99 = arith.addf %98, %84 : vector<8x128xf32>
    %cst_33 = arith.constant 0.000000e+00 : f32
    %100 = vector.broadcast %cst_33 : f32 to vector<8x128xf32>
    %101 = arith.maximumf %99, %100 : vector<8x128xf32>
    %102 = arith.truncf %101 : vector<8x128xf32> to vector<8x128xbf16>
    %c0_34 = arith.constant 0 : index
    %c2176 = arith.constant 2176 : index
    %103 = vector.load %arg2[%c0_34, %c2176] : memref<128x2688xbf16, #tpu.memory_space<vmem>>, vector<128x128xbf16>
    %cst_35 = arith.constant dense<0.000000e+00> : vector<8x128xf32>
    %104 = tpu.matmul %102, %103, %cst_35 {dimension_numbers = #tpu.dot_dimension_numbers<[1], [0], [0], [1], [0, 0, 1, 1], [], []>} : vector<8x128xbf16>, vector<128x128xbf16>, vector<8x128xf32> -> vector<8x128xf32>
    %105 = vector.extract_strided_slice %0 {offsets = [10, 0], sizes = [1, 128], strides = [1, 1]} : vector<16x128xf32> to vector<1x128xf32>
    %106 = vector.broadcast %105 : vector<1x128xf32> to vector<8x128xf32>
    %107 = arith.addf %7, %106 : vector<8x128xf32>
    %108 = arith.truncf %8 : vector<8x128xf32> to vector<8x128xbf16>
    %c0_36 = arith.constant 0 : index
    %c2304 = arith.constant 2304 : index
    %109 = vector.load %arg2[%c0_36, %c2304] : memref<128x2688xbf16, #tpu.memory_space<vmem>>, vector<128x128xbf16>
    %cst_37 = arith.constant dense<0.000000e+00> : vector<8x128xf32>
    %110 = tpu.matmul %108, %109, %cst_37 {dimension_numbers = #tpu.dot_dimension_numbers<[1], [0], [0], [1], [0, 0, 1, 1], [], []>} : vector<8x128xbf16>, vector<128x128xbf16>, vector<8x128xf32> -> vector<8x128xf32>
    %cst_38 = arith.constant 3.500000e+00 : f32
    %111 = vector.broadcast %cst_38 : f32 to vector<8x128xf32>
    %112 = arith.mulf %111, %110 : vector<8x128xf32>
    %113 = arith.addf %107, %112 : vector<8x128xf32>
    %114 = arith.truncf %113 : vector<8x128xf32> to vector<8x128xbf16>
    %c0_39 = arith.constant 0 : index
    %c2432 = arith.constant 2432 : index
    %115 = vector.load %arg2[%c0_39, %c2432] : memref<128x2688xbf16, #tpu.memory_space<vmem>>, vector<128x128xbf16>
    %cst_40 = arith.constant dense<0.000000e+00> : vector<8x128xf32>
    %116 = tpu.matmul %114, %115, %cst_40 {dimension_numbers = #tpu.dot_dimension_numbers<[1], [0], [0], [1], [0, 0, 1, 1], [], []>} : vector<8x128xbf16>, vector<128x128xbf16>, vector<8x128xf32> -> vector<8x128xf32>
    %117 = vector.extract_strided_slice %0 {offsets = [11, 0], sizes = [1, 128], strides = [1, 1]} : vector<16x128xf32> to vector<1x128xf32>
    %118 = vector.broadcast %117 : vector<1x128xf32> to vector<8x128xf32>
    %119 = arith.addf %116, %118 : vector<8x128xf32>
    %cst_41 = arith.constant 0.000000e+00 : f32
    %120 = vector.broadcast %cst_41 : f32 to vector<8x128xf32>
    %121 = arith.maximumf %119, %120 : vector<8x128xf32>
    %122 = arith.addf %121, %104 : vector<8x128xf32>
    %123 = arith.truncf %122 : vector<8x128xf32> to vector<8x128xbf16>
    %c0_42 = arith.constant 0 : index
    %c2560 = arith.constant 2560 : index
    %124 = vector.load %arg2[%c0_42, %c2560] : memref<128x2688xbf16, #tpu.memory_space<vmem>>, vector<128x128xbf16>
    %cst_43 = arith.constant dense<0.000000e+00> : vector<8x128xf32>
    %125 = tpu.matmul %123, %124, %cst_43 {dimension_numbers = #tpu.dot_dimension_numbers<[1], [0], [0], [1], [0, 0, 1, 1], [], []>} : vector<8x128xbf16>, vector<128x128xbf16>, vector<8x128xf32> -> vector<8x128xf32>
    %126 = vector.extract_strided_slice %0 {offsets = [12, 0], sizes = [1, 128], strides = [1, 1]} : vector<16x128xf32> to vector<1x128xf32>
    %127 = vector.broadcast %126 : vector<1x128xf32> to vector<8x128xf32>
    %128 = arith.addf %125, %127 : vector<8x128xf32>
    %c0_44 = arith.constant 0 : index
    %c0_45 = arith.constant 0 : index
    %129 = vector.load %arg4[%c0_44, %c0_45] : memref<8x128xf32, #tpu.memory_space<vmem>>, vector<8x128xf32>
    tpu.vector_store %arg4[%c0_44, %c0_45], %128 {strides = array<i32>} : memref<8x128xf32, #tpu.memory_space<vmem>>, vector<8x128xf32>,
    return
  }
  func.func @transform_0(%arg0: i32) -> (i32, i32) {
    %c0_i32 = arith.constant 0 : i32
    %c0_i32_0 = arith.constant 0 : i32
    return %arg0, %c0_i32 : i32, i32
  }
  func.func @transform_1(%arg0: i32) -> (i32, i32) {
    %c0_i32 = arith.constant 0 : i32
    %c0_i32_0 = arith.constant 0 : i32
    %c0_i32_1 = arith.constant 0 : i32
    return %c0_i32, %c0_i32_0 : i32, i32
  }
  func.func @transform_2(%arg0: i32) -> (i32, i32) {
    %c0_i32 = arith.constant 0 : i32
    %c0_i32_0 = arith.constant 0 : i32
    %c0_i32_1 = arith.constant 0 : i32
    return %c0_i32, %c0_i32_0 : i32, i32
  }
  func.func @transform_3(%arg0: i32) -> (i32, i32) {
    %c0_i32 = arith.constant 0 : i32
    %c0_i32_0 = arith.constant 0 : i32
    return %arg0, %c0_i32 : i32, i32
  }
}

</mosaic_0001>

<llo_original>
// kernel: tpu_custom_call.1
$region0: #{tpu_custom_call.1}
  #allocation0 [shape = 'u32[]', space=smem, size = 0x4, offset = 0x4, fixed_abs, tag = 'smem constant byte address 0x4 - core index']
  #allocation1 [shape = 'u32[144,128]{1,0:T(1,128)}', space=vmem, size = 0x12000, scoped, tag = 'internal scratch']
  %s0 = inlined_call_operand.hbm [shape: f32[8,128], index: 0, kind: input, shape index: {}]
  %s1 = inlined_call_operand.hbm [shape: bf16[128,2688], index: 1, kind: input, shape index: {}]
  %s2 = inlined_call_operand.hbm [shape: f32[16,128], index: 2, kind: input, shape index: {}]
  %s3 = inlined_call_operand.hbm [shape: f32[8,128], index: 3, kind: output, shape index: {}]
  %s4 = sld [smem:[#allocation0]]
  $region34: #{tpu_custom_call.1} parent=0
    _
  %s6 = ssub.s32 1, %s4
  %s7 = scalar_select 0, %s6, %s4
  $region1: #{tpu_custom_call.1} parent=0
    #allocation2 [shape = 'u8[4096]{0}', space=vmem, size = 0x1000, scoped, tag = 'input window, operand 0, single buffered']
    #allocation3 [shape = 's32[1]{0}', space=sflag, size = 0x4, scoped, tag = 'scoped memory for tpu_custom_call.1']
    #allocation4 [shape = 's32[1]{0}', space=sflag, size = 0x4, scoped, tag = 'scoped memory for tpu_custom_call.1']
    #allocation5 [shape = 'u8[688128]{0}', space=vmem, size = 0xa8000, scoped, tag = 'input window, operand 1, single buffered']
    #allocation6 [shape = 's32[1]{0}', space=sflag, size = 0x4, scoped, tag = 'scoped memory for tpu_custom_call.1']
    #allocation7 [shape = 'u8[8192]{0}', space=vmem, size = 0x2000, scoped, tag = 'input window, operand 2, single buffered']
    #allocation8 [shape = 'u8[4096]{0}', space=vmem, size = 0x1000, scoped, tag = 'output window, operand 0, single buffered']
    %8 = vsyncpa [#allocation3], 0
    %9 = vsyncpa [#allocation6], 0
    %10 = vsyncpa [#allocation4], 0
    // Predicated region
    $region2: #{tpu_custom_call.1} parent=1 // pred_check
      _
    $region3: #{tpu_custom_call.1} parent=1 // pred_check_branch
      %12 = sbr.rel (0) target = $region5
    $region4: #{tpu_custom_call.1} parent=1 // pred_region
      %s14 = ssub.s32 128, 128
      %15 = vsyncadd [#allocation3], %s14
      %s17 = sshll.u32 [#allocation2], 4
      %s18 = int_to_ptr.vmem [resolvable:$true] %s17
      %20 = dma.hbm_to_vmem [thread:$0]  %s0, 128, %s18, [#allocation3]
    $region5: #{tpu_custom_call.1} parent=1 // pred_fallthru
      _
    // Predicated region
    $region6: #{tpu_custom_call.1} parent=1 // pred_check
      _
    $region7: #{tpu_custom_call.1} parent=1 // pred_check_branch
      %22 = sbr.rel (0) target = $region9
    $region8: #{tpu_custom_call.1} parent=1 // pred_region
      %s24 = ssub.s32 21504, 21504
      %25 = vsyncadd [#allocation6], %s24
      %s26 = sshll.u32 [#allocation5], 4
      %s27 = int_to_ptr.vmem [resolvable:$true] %s26
      %32 = dma.hbm_to_vmem [thread:$0]  %s1, 21504, %s27, [#allocation6], 1344, 1344, 84
    $region9: #{tpu_custom_call.1} parent=1 // pred_fallthru
      _
    // Predicated region
    $region10: #{tpu_custom_call.1} parent=1 // pred_check
      _
    $region11: #{tpu_custom_call.1} parent=1 // pred_check_branch
      %34 = sbr.rel (0) target = $region13
    $region12: #{tpu_custom_call.1} parent=1 // pred_region
      %s36 = ssub.s32 256, 256
      %37 = vsyncadd [#allocation6], %s36
      %s38 = sshll.u32 [#allocation7], 4
      %s39 = int_to_ptr.vmem [resolvable:$true] %s38
      %44 = dma.hbm_to_vmem [thread:$0]  %s2, 256, %s39, [#allocation6], 128, 128, 8
    $region13: #{tpu_custom_call.1} parent=1 // pred_fallthru
      _
    // Predicated region
    $region14: #{tpu_custom_call.1} parent=1 // pred_check
      _
    $region15: #{tpu_custom_call.1} parent=1 // pred_check_branch
      %46 = sbr.rel (0) target = $region17
    $region16: #{tpu_custom_call.1} parent=1 // pred_region
      %47 = dma.done [#allocation3], 128
    $region17: #{tpu_custom_call.1} parent=1 // pred_fallthru
      _
    // Predicated region
    $region18: #{tpu_custom_call.1} parent=1 // pred_check
      _
    $region19: #{tpu_custom_call.1} parent=1 // pred_check_branch
      %49 = sbr.rel (0) target = $region21
    $region20: #{tpu_custom_call.1} parent=1 // pred_region
      %50 = dma.done [#allocation6], 21504
    $region21: #{tpu_custom_call.1} parent=1 // pred_fallthru
      _
    // Predicated region
    $region22: #{tpu_custom_call.1} parent=1 // pred_check
      _
    $region23: #{tpu_custom_call.1} parent=1 // pred_check_branch
      %52 = sbr.rel (0) target = $region25
    $region24: #{tpu_custom_call.1} parent=1 // pred_region
      %53 = dma.done [#allocation6], 256
    $region25: #{tpu_custom_call.1} parent=1 // pred_fallthru
      _
    %v55 = vld [vmem:[#allocation7] sm:$0xff]
    %v56 = vld [vmem:[#allocation7 + $0x8] sm:$0xff]
    %v57 = vld [vmem:[#allocation2] sm:$0xff]
    %v58 = vpack.c.bf16 %v57, %v57
    %v59 = vld [vmem:[#allocation5] sm:$0xff]
    %v60 = vld [vmem:[#allocation5 + $0x8] sm:$0xff]
    %v61 = vld [vmem:[#allocation5 + $0x54] sm:$0xff]
    %v62 = vld [vmem:[#allocation5 + $0x5c] sm:$0xff]
    %v63 = vld [vmem:[#allocation5 + $0xa8] sm:$0xff]
    %v64 = vld [vmem:[#allocation5 + $0xb0] sm:$0xff]
    %v65 = vld [vmem:[#allocation5 + $0xfc] sm:$0xff]
    %v66 = vld [vmem:[#allocation5 + $0x104] sm:$0xff]
    %v67 = vld [vmem:[#allocation5 + $0x150] sm:$0xff]
    %v68 = vld [vmem:[#allocation5 + $0x158] sm:$0xff]
    %v69 = vld [vmem:[#allocation5 + $0x1a4] sm:$0xff]
    %v70 = vld [vmem:[#allocation5 + $0x1ac] sm:$0xff]
    %v71 = vld [vmem:[#allocation5 + $0x1f8] sm:$0xff]
    %v72 = vld [vmem:[#allocation5 + $0x200] sm:$0xff]
    %v73 = vld [vmem:[#allocation5 + $0x24c] sm:$0xff]
    %v74 = vld [vmem:[#allocation5 + $0x254] sm:$0xff]
    %v75 = vld [vmem:[#allocation5 + $0x2a0] sm:$0xff]
    %v76 = vld [vmem:[#allocation5 + $0x2a8] sm:$0xff]
    %v77 = vld [vmem:[#allocation5 + $0x2f4] sm:$0xff]
    %v78 = vld [vmem:[#allocation5 + $0x2fc] sm:$0xff]
    %v79 = vld [vmem:[#allocation5 + $0x348] sm:$0xff]
    %v80 = vld [vmem:[#allocation5 + $0x350] sm:$0xff]
    %v81 = vld [vmem:[#allocation5 + $0x39c] sm:$0xff]
    %v82 = vld [vmem:[#allocation5 + $0x3a4] sm:$0xff]
    %v83 = vld [vmem:[#allocation5 + $0x3f0] sm:$0xff]
    %v84 = vld [vmem:[#allocation5 + $0x3f8] sm:$0xff]
    %v85 = vld [vmem:[#allocation5 + $0x444] sm:$0xff]
    %v86 = vld [vmem:[#allocation5 + $0x44c] sm:$0xff]
    %v87 = vld [vmem:[#allocation5 + $0x498] sm:$0xff]
    %v88 = vld [vmem:[#allocation5 + $0x4a0] sm:$0xff]
    %v89 = vld [vmem:[#allocation5 + $0x4ec] sm:$0xff]
    %v90 = vld [vmem:[#allocation5 + $0x4f4] sm:$0xff]
    %v123 = vunpack.c.l.b16 %v59
    %v124 = vunpack.c.h.b16 %v59
    %v125 = vunpack.c.l.b16 %v60
    %v126 = vunpack.c.h.b16 %v60
    %v127 = vunpack.c.l.b16 %v61
    %v128 = vunpack.c.h.b16 %v61
    %v129 = vunpack.c.l.b16 %v62
    %v130 = vunpack.c.h.b16 %v62
    %v131 = vunpack.c.l.b16 %v63
    %v132 = vunpack.c.h.b16 %v63
    %v133 = vunpack.c.l.b16 %v64
    %v134 = vunpack.c.h.b16 %v64
    %v135 = vunpack.c.l.b16 %v65
    %v136 = vunpack.c.h.b16 %v65
    %v137 = vunpack.c.l.b16 %v66
    %v138 = vunpack.c.h.b16 %v66
    %v139 = vunpack.c.l.b16 %v67
    %v140 = vunpack.c.h.b16 %v67
    %v141 = vunpack.c.l.b16 %v68
    %v142 = vunpack.c.h.b16 %v68
    %v143 = vunpack.c.l.b16 %v69
    %v144 = vunpack.c.h.b16 %v69
    %v145 = vunpack.c.l.b16 %v70
    %v146 = vunpack.c.h.b16 %v70
    %v147 = vunpack.c.l.b16 %v71
    %v148 = vunpack.c.h.b16 %v71
    %v149 = vunpack.c.l.b16 %v72
    %v150 = vunpack.c.h.b16 %v72
    %v151 = vunpack.c.l.b16 %v73
    %v152 = vunpack.c.h.b16 %v73
    %v153 = vunpack.c.l.b16 %v74
    %v154 = vunpack.c.h.b16 %v74
    %v155 = vunpack.c.l.b16 %v75
    %v156 = vunpack.c.h.b16 %v75
    %v157 = vunpack.c.l.b16 %v76
    %v158 = vunpack.c.h.b16 %v76
    %v159 = vunpack.c.l.b16 %v77
    %v160 = vunpack.c.h.b16 %v77
    %v161 = vunpack.c.l.b16 %v78
    %v162 = vunpack.c.h.b16 %v78
    %v163 = vunpack.c.l.b16 %v79
    %v164 = vunpack.c.h.b16 %v79
    %v165 = vunpack.c.l.b16 %v80
    %v166 = vunpack.c.h.b16 %v80
    %v167 = vunpack.c.l.b16 %v81
    %v168 = vunpack.c.h.b16 %v81
    %v169 = vunpack.c.l.b16 %v82
    %v170 = vunpack.c.h.b16 %v82
    %v171 = vunpack.c.l.b16 %v83
    %v172 = vunpack.c.h.b16 %v83
    %v173 = vunpack.c.l.b16 %v84
    %v174 = vunpack.c.h.b16 %v84
    %v175 = vunpack.c.l.b16 %v85
    %v176 = vunpack.c.h.b16 %v85
    %v177 = vunpack.c.l.b16 %v86
    %v178 = vunpack.c.h.b16 %v86
    %v179 = vunpack.c.l.b16 %v87
    %v180 = vunpack.c.h.b16 %v87
    %v181 = vunpack.c.l.b16 %v88
    %v182 = vunpack.c.h.b16 %v88
    %v183 = vunpack.c.l.b16 %v89
    %v184 = vunpack.c.h.b16 %v89
    %v185 = vunpack.c.l.b16 %v90
    %v186 = vunpack.c.h.b16 %v90
    %v187 = vpack.c.b16 %v127, %v123
    %v188 = vpack.c.b16 %v128, %v124
    %v189 = vpack.c.b16 %v129, %v125
    %v190 = vpack.c.b16 %v130, %v126
    %v191 = vpack.c.b16 %v135, %v131
    %v192 = vpack.c.b16 %v136, %v132
    %v193 = vpack.c.b16 %v137, %v133
    %v194 = vpack.c.b16 %v138, %v134
    %v195 = vpack.c.b16 %v143, %v139
    %v196 = vpack.c.b16 %v144, %v140
    %v197 = vpack.c.b16 %v145, %v141
    %v198 = vpack.c.b16 %v146, %v142
    %v199 = vpack.c.b16 %v151, %v147
    %v200 = vpack.c.b16 %v152, %v148
    %v201 = vpack.c.b16 %v153, %v149
    %v202 = vpack.c.b16 %v154, %v150
    %v203 = vpack.c.b16 %v159, %v155
    %v204 = vpack.c.b16 %v160, %v156
    %v205 = vpack.c.b16 %v161, %v157
    %v206 = vpack.c.b16 %v162, %v158
    %v207 = vpack.c.b16 %v167, %v163
    %v208 = vpack.c.b16 %v168, %v164
    %v209 = vpack.c.b16 %v169, %v165
    %v210 = vpack.c.b16 %v170, %v166
    %v211 = vpack.c.b16 %v175, %v171
    %v212 = vpack.c.b16 %v176, %v172
    %v213 = vpack.c.b16 %v177, %v173
    %v214 = vpack.c.b16 %v178, %v174
    %v215 = vpack.c.b16 %v183, %v179
    %v216 = vpack.c.b16 %v184, %v180
    %v217 = vpack.c.b16 %v185, %v181
    %v218 = vpack.c.b16 %v186, %v182
    %251 = vmatprep.subr.bf16.mxu0 %v216
    %252 = vmatpush1.bf16.msra.mxu0 %v215
    %253 = vmatprep.subr.bf16.mxu0 %v212
    %254 = vmatpush1.bf16.msra.mxu0 %v211
    %255 = vmatprep.subr.bf16.mxu0 %v208
    %256 = vmatpush1.bf16.msra.mxu0 %v207
    %257 = vmatprep.subr.bf16.mxu0 %v204
    %258 = vmatpush1.bf16.msra.mxu0 %v203
    %259 = vmatprep.subr.bf16.mxu0 %v200
    %260 = vmatpush1.bf16.msra.mxu0 %v199
    %261 = vmatprep.subr.bf16.mxu0 %v196
    %262 = vmatpush1.bf16.msra.mxu0 %v195
    %263 = vmatprep.subr.bf16.mxu0 %v192
    %264 = vmatpush1.bf16.msra.mxu0 %v191
    %265 = vmatprep.subr.bf16.mxu0 %v188
    %266 = vmatpush1.bf16.msra.mxu0 %v187
    %267 = vmatprep.subr.bf16.mxu0 0
    %268 = vmatpush2.bf16.msra.mxu0 0
    %269 = vmatprep.subr.bf16.mxu0 0
    %270 = vmatpush2.bf16.msra.mxu0 0
    %271 = vmatprep.subr.bf16.mxu0 0
    %272 = vmatpush2.bf16.msra.mxu0 0
    %273 = vmatprep.subr.bf16.mxu0 0
    %274 = vmatpush2.bf16.msra.mxu0 0
    %275 = vmatprep.subr.bf16.mxu0 0
    %276 = vmatpush2.bf16.msra.mxu0 0
    %277 = vmatprep.subr.bf16.mxu0 0
    %278 = vmatpush2.bf16.msra.mxu0 0
    %279 = vmatprep.subr.bf16.mxu0 0
    %280 = vmatpush2.bf16.msra.mxu0 0
    %281 = vmatprep.subr.bf16.mxu0 0
    %282 = vmatpush2.bf16.msra.mxu0 0
    %283 = vmatprep.mubr.bf16.mxu0 0
    %284 = vmatmul.mubr.bf16.gmra.mxu0 %v58
    %v285 = vpop.f32.mrf.mxu0
    %v286 = vadd.f32 0.0, %v285
    %v287 = vpop.f32.mrf.mxu0
    %v288 = vadd.f32 0.0, %v287
    %v289 = vpop.f32.mrf.mxu0
    %v290 = vpop.f32.mrf.mxu0
    %291 = vdwg.mxu0
    %292 = vmatprep.subr.bf16.mxu0 %v218
    %293 = vmatpush1.bf16.msra.mxu0 %v217
    %294 = vmatprep.subr.bf16.mxu0 %v214
    %295 = vmatpush1.bf16.msra.mxu0 %v213
    %296 = vmatprep.subr.bf16.mxu0 %v210
    %297 = vmatpush1.bf16.msra.mxu0 %v209
    %298 = vmatprep.subr.bf16.mxu0 %v206
    %299 = vmatpush1.bf16.msra.mxu0 %v205
    %300 = vmatprep.subr.bf16.mxu0 %v202
    %301 = vmatpush1.bf16.msra.mxu0 %v201
    %302 = vmatprep.subr.bf16.mxu0 %v198
    %303 = vmatpush1.bf16.msra.mxu0 %v197
    %304 = vmatprep.subr.bf16.mxu0 %v194
    %305 = vmatpush1.bf16.msra.mxu0 %v193
    %306 = vmatprep.subr.bf16.mxu0 %v190
    %307 = vmatpush1.bf16.msra.mxu0 %v189
    %308 = vmatprep.subr.bf16.mxu0 0
    %309 = vmatpush2.bf16.msra.mxu0 0
    %310 = vmatprep.subr.bf16.mxu0 0
    %311 = vmatpush2.bf16.msra.mxu0 0
    %312 = vmatprep.subr.bf16.mxu0 0
    %313 = vmatpush2.bf16.msra.mxu0 0
    %314 = vmatprep.subr.bf16.mxu0 0
    %315 = vmatpush2.bf16.msra.mxu0 0
    %316 = vmatprep.subr.bf16.mxu0 0
    %317 = vmatpush2.bf16.msra.mxu0 0
    %318 = vmatprep.subr.bf16.mxu0 0
    %319 = vmatpush2.bf16.msra.mxu0 0
    %320 = vmatprep.subr.bf16.mxu0 0
    %321 = vmatpush2.bf16.msra.mxu0 0
    %322 = vmatprep.subr.bf16.mxu0 0
    %323 = vmatpush2.bf16.msra.mxu0 0
    %324 = vmatprep.mubr.bf16.mxu0 0
    %325 = vmatmul.mubr.bf16.gmra.mxu0 %v58
    %v326 = vpop.f32.mrf.mxu0
    %v327 = vadd.f32 0.0, %v326
    %v328 = vpop.f32.mrf.mxu0
    %v329 = vadd.f32 0.0, %v328
    %v330 = vpop.f32.mrf.mxu0
    %v331 = vpop.f32.mrf.mxu0
    %332 = vdwg.mxu0
    %v333 = vmul.f32 %v286, %v286
    %v334 = vmul.f32 %v288, %v288
    %v335 = vadd.f32 %v333, %v334
    %v336 = vrsqrt.pop %v335
    %v337 = vmul.f32 %v335, %v336
    %vm338 = vcmp.eq.f32.partialorder %v335, inf
    %v339 = vsel %vm338, %v335, %v337
    %vm340 = vcmp.eq.f32.partialorder %v335, 0.0
    %v341 = vand.u32 %v335, 2147483648
    %v342 = vsel %vm340, %v341, %v339
    %v343 = vpack.c.bf16 %v342, %v342
    %v344 = vld [vmem:[#allocation5 + $0x10] sm:$0xf]
    %v345 = vld [vmem:[#allocation5 + $0x64] sm:$0xf]
    %v346 = vld [vmem:[#allocation5 + $0xb8] sm:$0xf]
    %v347 = vld [vmem:[#allocation5 + $0x10c] sm:$0xf]
    %v348 = vld [vmem:[#allocation5 + $0x160] sm:$0xf]
    %v349 = vld [vmem:[#allocation5 + $0x1b4] sm:$0xf]
    %v350 = vld [vmem:[#allocation5 + $0x208] sm:$0xf]
    %v351 = vld [vmem:[#allocation5 + $0x25c] sm:$0xf]
    %v352 = vld [vmem:[#allocation5 + $0x2b0] sm:$0xf]
    %v353 = vld [vmem:[#allocation5 + $0x304] sm:$0xf]
    %v354 = vld [vmem:[#allocation5 + $0x358] sm:$0xf]
    %v355 = vld [vmem:[#allocation5 + $0x3ac] sm:$0xf]
    %v356 = vld [vmem:[#allocation5 + $0x400] sm:$0xf]
    %v357 = vld [vmem:[#allocation5 + $0x454] sm:$0xf]
    %v358 = vld [vmem:[#allocation5 + $0x4a8] sm:$0xf]
    %v359 = vld [vmem:[#allocation5 + $0x4fc] sm:$0xf]
    %v360 = vlaneseq
    %v361 = vshrl.u32 %v360, 7
    %v362 = vsub.s32 0, %v361
    %v363 = vrot.slane %v55, %v362
    %v380 = vunpack.c.l.b16 %v344
    %v381 = vunpack.c.l.b16 %v345
    %v382 = vunpack.c.l.b16 %v346
    %v383 = vunpack.c.l.b16 %v347
    %v384 = vunpack.c.l.b16 %v348
    %v385 = vunpack.c.l.b16 %v349
    %v386 = vunpack.c.l.b16 %v350
    %v387 = vunpack.c.l.b16 %v351
    %v388 = vunpack.c.l.b16 %v352
    %v389 = vunpack.c.l.b16 %v353
    %v390 = vunpack.c.l.b16 %v354
    %v391 = vunpack.c.l.b16 %v355
    %v392 = vunpack.c.l.b16 %v356
    %v393 = vunpack.c.l.b16 %v357
    %v394 = vunpack.c.l.b16 %v358
    %v395 = vunpack.c.l.b16 %v359
    %v396 = vpack.c.b16 %v381, %v380
    %v397 = vpack.c.b16 %v383, %v382
    %v398 = vpack.c.b16 %v385, %v384
    %v399 = vpack.c.b16 %v387, %v386
    %v400 = vpack.c.b16 %v389, %v388
    %v401 = vpack.c.b16 %v391, %v390
    %v402 = vpack.c.b16 %v393, %v392
    %v403 = vpack.c.b16 %v395, %v394
    %412 = vmatprep.subr.bf16.mxu0 0
    %413 = vmatpush1.bf16.msra.mxu0 %v403
    %414 = vmatprep.subr.bf16.mxu0 0
    %415 = vmatpush1.bf16.msra.mxu0 %v402
    %416 = vmatprep.subr.bf16.mxu0 0
    %417 = vmatpush1.bf16.msra.mxu0 %v401
    %418 = vmatprep.subr.bf16.mxu0 0
    %419 = vmatpush1.bf16.msra.mxu0 %v400
    %420 = vmatprep.subr.bf16.mxu0 0
    %421 = vmatpush1.bf16.msra.mxu0 %v399
    %422 = vmatprep.subr.bf16.mxu0 0
    %423 = vmatpush1.bf16.msra.mxu0 %v398
    %424 = vmatprep.subr.bf16.mxu0 0
    %425 = vmatpush1.bf16.msra.mxu0 %v397
    %426 = vmatprep.subr.bf16.mxu0 0
    %427 = vmatpush1.bf16.msra.mxu0 %v396
    %428 = vmatprep.subr.bf16.mxu0 0
    %429 = vmatpush2.bf16.msra.mxu0 0
    %430 = vmatprep.subr.bf16.mxu0 0
    %431 = vmatpush2.bf16.msra.mxu0 0
    %432 = vmatprep.subr.bf16.mxu0 0
    %433 = vmatpush2.bf16.msra.mxu0 0
    %434 = vmatprep.subr.bf16.mxu0 0
    %435 = vmatpush2.bf16.msra.mxu0 0
    %436 = vmatprep.subr.bf16.mxu0 0
    %437 = vmatpush2.bf16.msra.mxu0 0
    %438 = vmatprep.subr.bf16.mxu0 0
    %439 = vmatpush2.bf16.msra.mxu0 0
    %440 = vmatprep.subr.bf16.mxu0 0
    %441 = vmatpush2.bf16.msra.mxu0 0
    %442 = vmatprep.subr.bf16.mxu0 0
    %443 = vmatpush2.bf16.msra.mxu0 0
    %444 = vmatprep.mubr.bf16.mxu0 0
    %445 = vmatmul.mubr.bf16.gmra.mxu0 %v343
    %v446 = vpop.f32.mrf.mxu0
    %v447 = vadd.f32 %v363, %v446
    %v448 = vpop.f32.mrf.mxu0
    %v449 = vpop.f32.mrf.mxu0
    %v450 = vpop.f32.mrf.mxu0
    %451 = vdwg.mxu0
    %v452 = vmax.f32 %v447, 0.0
    %v453 = vpack.c.bf16 %v452, %v452
    %v454 = vld [vmem:[#allocation5 + $0x14] sm:$0xff]
    %v455 = vld [vmem:[#allocation5 + $0x1c] sm:$0xf]
    %v456 = vld [vmem:[#allocation5 + $0x68] sm:$0xff]
    %v457 = vld [vmem:[#allocation5 + $0x70] sm:$0xf]
    %v458 = vld [vmem:[#allocation5 + $0xbc] sm:$0xff]
    %v459 = vld [vmem:[#allocation5 + $0xc4] sm:$0xf]
    %v460 = vld [vmem:[#allocation5 + $0x110] sm:$0xff]
    %v461 = vld [vmem:[#allocation5 + $0x118] sm:$0xf]
    %v462 = vld [vmem:[#allocation5 + $0x164] sm:$0xff]
    %v463 = vld [vmem:[#allocation5 + $0x16c] sm:$0xf]
    %v464 = vld [vmem:[#allocation5 + $0x1b8] sm:$0xff]
    %v465 = vld [vmem:[#allocation5 + $0x1c0] sm:$0xf]
    %v466 = vld [vmem:[#allocation5 + $0x20c] sm:$0xff]
    %v467 = vld [vmem:[#allocation5 + $0x214] sm:$0xf]
    %v468 = vld [vmem:[#allocation5 + $0x260] sm:$0xff]
    %v469 = vld [vmem:[#allocation5 + $0x268] sm:$0xf]
    %v470 = vld [vmem:[#allocation5 + $0x2b4] sm:$0xff]
    %v471 = vld [vmem:[#allocation5 + $0x2bc] sm:$0xf]
    %v472 = vld [vmem:[#allocation5 + $0x308] sm:$0xff]
    %v473 = vld [vmem:[#allocation5 + $0x310] sm:$0xf]
    %v474 = vld [vmem:[#allocation5 + $0x35c] sm:$0xff]
    %v475 = vld [vmem:[#allocation5 + $0x364] sm:$0xf]
    %v476 = vld [vmem:[#allocation5 + $0x3b0] sm:$0xff]
    %v477 = vld [vmem:[#allocation5 + $0x3b8] sm:$0xf]
    %v478 = vld [vmem:[#allocation5 + $0x404] sm:$0xff]
    %v479 = vld [vmem:[#allocation5 + $0x40c] sm:$0xf]
    %v480 = vld [vmem:[#allocation5 + $0x458] sm:$0xff]
    %v481 = vld [vmem:[#allocation5 + $0x460] sm:$0xf]
    %v482 = vld [vmem:[#allocation5 + $0x4ac] sm:$0xff]
    %v483 = vld [vmem:[#allocation5 + $0x4b4] sm:$0xf]
    %v484 = vld [vmem:[#allocation5 + $0x500] sm:$0xff]
    %v485 = vld [vmem:[#allocation5 + $0x508] sm:$0xf]
    %v518 = vunpack.c.l.b16 %v454
    %v519 = vunpack.c.h.b16 %v454
    %v520 = vunpack.c.l.b16 %v455
    %v521 = vunpack.c.l.b16 %v456
    %v522 = vunpack.c.h.b16 %v456
    %v523 = vunpack.c.l.b16 %v457
    %v524 = vunpack.c.l.b16 %v458
    %v525 = vunpack.c.h.b16 %v458
    %v526 = vunpack.c.l.b16 %v459
    %v527 = vunpack.c.l.b16 %v460
    %v528 = vunpack.c.h.b16 %v460
    %v529 = vunpack.c.l.b16 %v461
    %v530 = vunpack.c.l.b16 %v462
    %v531 = vunpack.c.h.b16 %v462
    %v532 = vunpack.c.l.b16 %v463
    %v533 = vunpack.c.l.b16 %v464
    %v534 = vunpack.c.h.b16 %v464
    %v535 = vunpack.c.l.b16 %v465
    %v536 = vunpack.c.l.b16 %v466
    %v537 = vunpack.c.h.b16 %v466
    %v538 = vunpack.c.l.b16 %v467
    %v539 = vunpack.c.l.b16 %v468
    %v540 = vunpack.c.h.b16 %v468
    %v541 = vunpack.c.l.b16 %v469
    %v542 = vunpack.c.l.b16 %v470
    %v543 = vunpack.c.h.b16 %v470
    %v544 = vunpack.c.l.b16 %v471
    %v545 = vunpack.c.l.b16 %v472
    %v546 = vunpack.c.h.b16 %v472
    %v547 = vunpack.c.l.b16 %v473
    %v548 = vunpack.c.l.b16 %v474
    %v549 = vunpack.c.h.b16 %v474
    %v550 = vunpack.c.l.b16 %v475
    %v551 = vunpack.c.l.b16 %v476
    %v552 = vunpack.c.h.b16 %v476
    %v553 = vunpack.c.l.b16 %v477
    %v554 = vunpack.c.l.b16 %v478
    %v555 = vunpack.c.h.b16 %v478
    %v556 = vunpack.c.l.b16 %v479
    %v557 = vunpack.c.l.b16 %v480
    %v558 = vunpack.c.h.b16 %v480
    %v559 = vunpack.c.l.b16 %v481
    %v560 = vunpack.c.l.b16 %v482
    %v561 = vunpack.c.h.b16 %v482
    %v562 = vunpack.c.l.b16 %v483
    %v563 = vunpack.c.l.b16 %v484
    %v564 = vunpack.c.h.b16 %v484
    %v565 = vunpack.c.l.b16 %v485
    %v566 = vpack.c.b16 %v521, %v518
    %v567 = vpack.c.b16 %v522, %v519
    %v568 = vpack.c.b16 %v523, %v520
    %v569 = vpack.c.b16 %v527, %v524
    %v570 = vpack.c.b16 %v528, %v525
    %v571 = vpack.c.b16 %v529, %v526
    %v572 = vpack.c.b16 %v533, %v530
    %v573 = vpack.c.b16 %v534, %v531
    %v574 = vpack.c.b16 %v535, %v532
    %v575 = vpack.c.b16 %v539, %v536
    %v576 = vpack.c.b16 %v540, %v537
    %v577 = vpack.c.b16 %v541, %v538
    %v578 = vpack.c.b16 %v545, %v542
    %v579 = vpack.c.b16 %v546, %v543
    %v580 = vpack.c.b16 %v547, %v544
    %v581 = vpack.c.b16 %v551, %v548
    %v582 = vpack.c.b16 %v552, %v549
    %v583 = vpack.c.b16 %v553, %v550
    %v584 = vpack.c.b16 %v557, %v554
    %v585 = vpack.c.b16 %v558, %v555
    %v586 = vpack.c.b16 %v559, %v556
    %v587 = vpack.c.b16 %v563, %v560
    %v588 = vpack.c.b16 %v564, %v561
    %v589 = vpack.c.b16 %v565, %v562
    %614 = vmatprep.subr.bf16.mxu0 %v588
    %615 = vmatpush1.bf16.msra.mxu0 %v587
    %616 = vmatprep.subr.bf16.mxu0 %v585
    %617 = vmatpush1.bf16.msra.mxu0 %v584
    %618 = vmatprep.subr.bf16.mxu0 %v582
    %619 = vmatpush1.bf16.msra.mxu0 %v581
    %620 = vmatprep.subr.bf16.mxu0 %v579
    %621 = vmatpush1.bf16.msra.mxu0 %v578
    %622 = vmatprep.subr.bf16.mxu0 %v576
    %623 = vmatpush1.bf16.msra.mxu0 %v575
    %624 = vmatprep.subr.bf16.mxu0 %v573
    %625 = vmatpush1.bf16.msra.mxu0 %v572
    %626 = vmatprep.subr.bf16.mxu0 %v570
    %627 = vmatpush1.bf16.msra.mxu0 %v569
    %628 = vmatprep.subr.bf16.mxu0 %v567
    %629 = vmatpush1.bf16.msra.mxu0 %v566
    %630 = vmatprep.subr.bf16.mxu0 0
    %631 = vmatpush2.bf16.msra.mxu0 0
    %632 = vmatprep.subr.bf16.mxu0 0
    %633 = vmatpush2.bf16.msra.mxu0 0
    %634 = vmatprep.subr.bf16.mxu0 0
    %635 = vmatpush2.bf16.msra.mxu0 0
    %636 = vmatprep.subr.bf16.mxu0 0
    %637 = vmatpush2.bf16.msra.mxu0 0
    %638 = vmatprep.subr.bf16.mxu0 0
    %639 = vmatpush2.bf16.msra.mxu0 0
    %640 = vmatprep.subr.bf16.mxu0 0
    %641 = vmatpush2.bf16.msra.mxu0 0
    %642 = vmatprep.subr.bf16.mxu0 0
    %643 = vmatpush2.bf16.msra.mxu0 0
    %644 = vmatprep.subr.bf16.mxu0 0
    %645 = vmatpush2.bf16.msra.mxu0 0
    %646 = vmatprep.mubr.bf16.mxu0 0
    %647 = vmatmul.mubr.bf16.gmra.mxu0 %v453
    %v648 = vpop.f32.mrf.mxu0
    %v649 = vadd.f32 0.0, %v648
    %v650 = vpop.f32.mrf.mxu0
    %v651 = vadd.f32 0.0, %v650
    %v652 = vpop.f32.mrf.mxu0
    %v653 = vpop.f32.mrf.mxu0
    %654 = vdwg.mxu0
    %655 = vmatprep.subr.bf16.mxu0 0
    %656 = vmatpush1.bf16.msra.mxu0 %v589
    %657 = vmatprep.subr.bf16.mxu0 0
    %658 = vmatpush1.bf16.msra.mxu0 %v586
    %659 = vmatprep.subr.bf16.mxu0 0
    %660 = vmatpush1.bf16.msra.mxu0 %v583
    %661 = vmatprep.subr.bf16.mxu0 0
    %662 = vmatpush1.bf16.msra.mxu0 %v580
    %663 = vmatprep.subr.bf16.mxu0 0
    %664 = vmatpush1.bf16.msra.mxu0 %v577
    %665 = vmatprep.subr.bf16.mxu0 0
    %666 = vmatpush1.bf16.msra.mxu0 %v574
    %667 = vmatprep.subr.bf16.mxu0 0
    %668 = vmatpush1.bf16.msra.mxu0 %v571
    %669 = vmatprep.subr.bf16.mxu0 0
    %670 = vmatpush1.bf16.msra.mxu0 %v568
    %671 = vmatprep.subr.bf16.mxu0 0
    %672 = vmatpush2.bf16.msra.mxu0 0
    %673 = vmatprep.subr.bf16.mxu0 0
    %674 = vmatpush2.bf16.msra.mxu0 0
    %675 = vmatprep.subr.bf16.mxu0 0
    %676 = vmatpush2.bf16.msra.mxu0 0
    %677 = vmatprep.subr.bf16.mxu0 0
    %678 = vmatpush2.bf16.msra.mxu0 0
    %679 = vmatprep.subr.bf16.mxu0 0
    %680 = vmatpush2.bf16.msra.mxu0 0
    %681 = vmatprep.subr.bf16.mxu0 0
    %682 = vmatpush2.bf16.msra.mxu0 0
    %683 = vmatprep.subr.bf16.mxu0 0
    %684 = vmatpush2.bf16.msra.mxu0 0
    %685 = vmatprep.subr.bf16.mxu0 0
    %686 = vmatpush2.bf16.msra.mxu0 0
    %687 = vmatprep.mubr.bf16.mxu0 0
    %688 = vmatmul.mubr.bf16.gmra.mxu0 %v453
    %v689 = vpop.f32.mrf.mxu0
    %v690 = vadd.f32 0.0, %v689
    %v691 = vpop.f32.mrf.mxu0
    %v692 = vpop.f32.mrf.mxu0
    %v693 = vpop.f32.mrf.mxu0
    %694 = vdwg.mxu0
    %v695 = vmax.f32 %v649, %v651
    %v696 = vmax.f32 %v695, %v690
    %v697 = vpack.c.bf16 %v696, %v696
    %v698 = vld [vmem:[#allocation5 + $0x20] sm:$0xf]
    %v699 = vld [vmem:[#allocation5 + $0x74] sm:$0xf]
    %v700 = vld [vmem:[#allocation5 + $0xc8] sm:$0xf]
    %v701 = vld [vmem:[#allocation5 + $0x11c] sm:$0xf]
    %v702 = vld [vmem:[#allocation5 + $0x170] sm:$0xf]
    %v703 = vld [vmem:[#allocation5 + $0x1c4] sm:$0xf]
    %v704 = vld [vmem:[#allocation5 + $0x218] sm:$0xf]
    %v705 = vld [vmem:[#allocation5 + $0x26c] sm:$0xf]
    %v706 = vld [vmem:[#allocation5 + $0x2c0] sm:$0xf]
    %v707 = vld [vmem:[#allocation5 + $0x314] sm:$0xf]
    %v708 = vld [vmem:[#allocation5 + $0x368] sm:$0xf]
    %v709 = vld [vmem:[#allocation5 + $0x3bc] sm:$0xf]
    %v710 = vld [vmem:[#allocation5 + $0x410] sm:$0xf]
    %v711 = vld [vmem:[#allocation5 + $0x464] sm:$0xf]
    %v712 = vld [vmem:[#allocation5 + $0x4b8] sm:$0xf]
    %v713 = vld [vmem:[#allocation5 + $0x50c] sm:$0xf]
    %v714 = vlaneseq
    %v715 = vshrl.u32 %v714, 7
    %v716 = vsub.s32 1, %v715
    %v717 = vrot.slane %v55, %v716
    %v734 = vunpack.c.l.b16 %v698
    %v735 = vunpack.c.l.b16 %v699
    %v736 = vunpack.c.l.b16 %v700
    %v737 = vunpack.c.l.b16 %v701
    %v738 = vunpack.c.l.b16 %v702
    %v739 = vunpack.c.l.b16 %v703
    %v740 = vunpack.c.l.b16 %v704
    %v741 = vunpack.c.l.b16 %v705
    %v742 = vunpack.c.l.b16 %v706
    %v743 = vunpack.c.l.b16 %v707
    %v744 = vunpack.c.l.b16 %v708
    %v745 = vunpack.c.l.b16 %v709
    %v746 = vunpack.c.l.b16 %v710
    %v747 = vunpack.c.l.b16 %v711
    %v748 = vunpack.c.l.b16 %v712
    %v749 = vunpack.c.l.b16 %v713
    %v750 = vpack.c.b16 %v735, %v734
    %v751 = vpack.c.b16 %v737, %v736
    %v752 = vpack.c.b16 %v739, %v738
    %v753 = vpack.c.b16 %v741, %v740
    %v754 = vpack.c.b16 %v743, %v742
    %v755 = vpack.c.b16 %v745, %v744
    %v756 = vpack.c.b16 %v747, %v746
    %v757 = vpack.c.b16 %v749, %v748
    %766 = vmatprep.subr.bf16.mxu0 0
    %767 = vmatpush1.bf16.msra.mxu0 %v757
    %768 = vmatprep.subr.bf16.mxu0 0
    %769 = vmatpush1.bf16.msra.mxu0 %v756
    %770 = vmatprep.subr.bf16.mxu0 0
    %771 = vmatpush1.bf16.msra.mxu0 %v755
    %772 = vmatprep.subr.bf16.mxu0 0
    %773 = vmatpush1.bf16.msra.mxu0 %v754
    %774 = vmatprep.subr.bf16.mxu0 0
    %775 = vmatpush1.bf16.msra.mxu0 %v753
    %776 = vmatprep.subr.bf16.mxu0 0
    %777 = vmatpush1.bf16.msra.mxu0 %v752
    %778 = vmatprep.subr.bf16.mxu0 0
    %779 = vmatpush1.bf16.msra.mxu0 %v751
    %780 = vmatprep.subr.bf16.mxu0 0
    %781 = vmatpush1.bf16.msra.mxu0 %v750
    %782 = vmatprep.subr.bf16.mxu0 0
    %783 = vmatpush2.bf16.msra.mxu0 0
    %784 = vmatprep.subr.bf16.mxu0 0
    %785 = vmatpush2.bf16.msra.mxu0 0
    %786 = vmatprep.subr.bf16.mxu0 0
    %787 = vmatpush2.bf16.msra.mxu0 0
    %788 = vmatprep.subr.bf16.mxu0 0
    %789 = vmatpush2.bf16.msra.mxu0 0
    %790 = vmatprep.subr.bf16.mxu0 0
    %791 = vmatpush2.bf16.msra.mxu0 0
    %792 = vmatprep.subr.bf16.mxu0 0
    %793 = vmatpush2.bf16.msra.mxu0 0
    %794 = vmatprep.subr.bf16.mxu0 0
    %795 = vmatpush2.bf16.msra.mxu0 0
    %796 = vmatprep.subr.bf16.mxu0 0
    %797 = vmatpush2.bf16.msra.mxu0 0
    %798 = vmatprep.mubr.bf16.mxu0 0
    %799 = vmatmul.mubr.bf16.gmra.mxu0 %v697
    %v800 = vpop.f32.mrf.mxu0
    %v801 = vadd.f32 %v717, %v800
    %v802 = vpop.f32.mrf.mxu0
    %v803 = vpop.f32.mrf.mxu0
    %v804 = vpop.f32.mrf.mxu0
    %805 = vdwg.mxu0
    %v806 = vmax.f32 %v801, 0.0
    %v807 = vpack.c.bf16 %v806, %v806
    %v808 = vld [vmem:[#allocation5 + $0x24] sm:$0xf]
    %v809 = vld [vmem:[#allocation5 + $0x78] sm:$0xf]
    %v810 = vld [vmem:[#allocation5 + $0xcc] sm:$0xf]
    %v811 = vld [vmem:[#allocation5 + $0x120] sm:$0xf]
    %v812 = vld [vmem:[#allocation5 + $0x174] sm:$0xf]
    %v813 = vld [vmem:[#allocation5 + $0x1c8] sm:$0xf]
    %v814 = vld [vmem:[#allocation5 + $0x21c] sm:$0xf]
    %v815 = vld [vmem:[#allocation5 + $0x270] sm:$0xf]
    %v816 = vld [vmem:[#allocation5 + $0x2c4] sm:$0xf]
    %v817 = vld [vmem:[#allocation5 + $0x318] sm:$0xf]
    %v818 = vld [vmem:[#allocation5 + $0x36c] sm:$0xf]
    %v819 = vld [vmem:[#allocation5 + $0x3c0] sm:$0xf]
    %v820 = vld [vmem:[#allocation5 + $0x414] sm:$0xf]
    %v821 = vld [vmem:[#allocation5 + $0x468] sm:$0xf]
    %v822 = vld [vmem:[#allocation5 + $0x4bc] sm:$0xf]
    %v823 = vld [vmem:[#allocation5 + $0x510] sm:$0xf]
    %v824 = vlaneseq
    %v825 = vshrl.u32 %v824, 7
    %v826 = vsub.s32 2, %v825
    %v827 = vrot.slane %v55, %v826
    %v844 = vunpack.c.l.b16 %v808
    %v845 = vunpack.c.l.b16 %v809
    %v846 = vunpack.c.l.b16 %v810
    %v847 = vunpack.c.l.b16 %v811
    %v848 = vunpack.c.l.b16 %v812
    %v849 = vunpack.c.l.b16 %v813
    %v850 = vunpack.c.l.b16 %v814
    %v851 = vunpack.c.l.b16 %v815
    %v852 = vunpack.c.l.b16 %v816
    %v853 = vunpack.c.l.b16 %v817
    %v854 = vunpack.c.l.b16 %v818
    %v855 = vunpack.c.l.b16 %v819
    %v856 = vunpack.c.l.b16 %v820
    %v857 = vunpack.c.l.b16 %v821
    %v858 = vunpack.c.l.b16 %v822
    %v859 = vunpack.c.l.b16 %v823
    %v860 = vpack.c.b16 %v845, %v844
    %v861 = vpack.c.b16 %v847, %v846
    %v862 = vpack.c.b16 %v849, %v848
    %v863 = vpack.c.b16 %v851, %v850
    %v864 = vpack.c.b16 %v853, %v852
    %v865 = vpack.c.b16 %v855, %v854
    %v866 = vpack.c.b16 %v857, %v856
    %v867 = vpack.c.b16 %v859, %v858
    %876 = vmatprep.subr.bf16.mxu0 0
    %877 = vmatpush1.bf16.msra.mxu0 %v867
    %878 = vmatprep.subr.bf16.mxu0 0
    %879 = vmatpush1.bf16.msra.mxu0 %v866
    %880 = vmatprep.subr.bf16.mxu0 0
    %881 = vmatpush1.bf16.msra.mxu0 %v865
    %882 = vmatprep.subr.bf16.mxu0 0
    %883 = vmatpush1.bf16.msra.mxu0 %v864
    %884 = vmatprep.subr.bf16.mxu0 0
    %885 = vmatpush1.bf16.msra.mxu0 %v863
    %886 = vmatprep.subr.bf16.mxu0 0
    %887 = vmatpush1.bf16.msra.mxu0 %v862
    %888 = vmatprep.subr.bf16.mxu0 0
    %889 = vmatpush1.bf16.msra.mxu0 %v861
    %890 = vmatprep.subr.bf16.mxu0 0
    %891 = vmatpush1.bf16.msra.mxu0 %v860
    %892 = vmatprep.subr.bf16.mxu0 0
    %893 = vmatpush2.bf16.msra.mxu0 0
    %894 = vmatprep.subr.bf16.mxu0 0
    %895 = vmatpush2.bf16.msra.mxu0 0
    %896 = vmatprep.subr.bf16.mxu0 0
    %897 = vmatpush2.bf16.msra.mxu0 0
    %898 = vmatprep.subr.bf16.mxu0 0
    %899 = vmatpush2.bf16.msra.mxu0 0
    %900 = vmatprep.subr.bf16.mxu0 0
    %901 = vmatpush2.bf16.msra.mxu0 0
    %902 = vmatprep.subr.bf16.mxu0 0
    %903 = vmatpush2.bf16.msra.mxu0 0
    %904 = vmatprep.subr.bf16.mxu0 0
    %905 = vmatpush2.bf16.msra.mxu0 0
    %906 = vmatprep.subr.bf16.mxu0 0
    %907 = vmatpush2.bf16.msra.mxu0 0
    %908 = vmatprep.mubr.bf16.mxu0 0
    %909 = vmatmul.mubr.bf16.gmra.mxu0 %v807
    %v910 = vpop.f32.mrf.mxu0
    %v911 = vadd.f32 %v827, %v910
    %v912 = vpop.f32.mrf.mxu0
    %v913 = vpop.f32.mrf.mxu0
    %v914 = vpop.f32.mrf.mxu0
    %915 = vdwg.mxu0
    %v916 = vadd.f32 %v911, %v696
    %v917 = vmax.f32 %v916, 0.0
    %v918 = vpack.c.bf16 %v917, %v917
    %v919 = vld [vmem:[#allocation5 + $0x28] sm:$0xf]
    %v920 = vld [vmem:[#allocation5 + $0x7c] sm:$0xf]
    %v921 = vld [vmem:[#allocation5 + $0xd0] sm:$0xf]
    %v922 = vld [vmem:[#allocation5 + $0x124] sm:$0xf]
    %v923 = vld [vmem:[#allocation5 + $0x178] sm:$0xf]
    %v924 = vld [vmem:[#allocation5 + $0x1cc] sm:$0xf]
    %v925 = vld [vmem:[#allocation5 + $0x220] sm:$0xf]
    %v926 = vld [vmem:[#allocation5 + $0x274] sm:$0xf]
    %v927 = vld [vmem:[#allocation5 + $0x2c8] sm:$0xf]
    %v928 = vld [vmem:[#allocation5 + $0x31c] sm:$0xf]
    %v929 = vld [vmem:[#allocation5 + $0x370] sm:$0xf]
    %v930 = vld [vmem:[#allocation5 + $0x3c4] sm:$0xf]
    %v931 = vld [vmem:[#allocation5 + $0x418] sm:$0xf]
    %v932 = vld [vmem:[#allocation5 + $0x46c] sm:$0xf]
    %v933 = vld [vmem:[#allocation5 + $0x4c0] sm:$0xf]
    %v934 = vld [vmem:[#allocation5 + $0x514] sm:$0xf]
    %v935 = vlaneseq
    %v936 = vshrl.u32 %v935, 7
    %v937 = vsub.s32 3, %v936
    %v938 = vrot.slane %v55, %v937
    %v955 = vunpack.c.l.b16 %v919
    %v956 = vunpack.c.l.b16 %v920
    %v957 = vunpack.c.l.b16 %v921
    %v958 = vunpack.c.l.b16 %v922
    %v959 = vunpack.c.l.b16 %v923
    %v960 = vunpack.c.l.b16 %v924
    %v961 = vunpack.c.l.b16 %v925
    %v962 = vunpack.c.l.b16 %v926
    %v963 = vunpack.c.l.b16 %v927
    %v964 = vunpack.c.l.b16 %v928
    %v965 = vunpack.c.l.b16 %v929
    %v966 = vunpack.c.l.b16 %v930
    %v967 = vunpack.c.l.b16 %v931
    %v968 = vunpack.c.l.b16 %v932
    %v969 = vunpack.c.l.b16 %v933
    %v970 = vunpack.c.l.b16 %v934
    %v971 = vpack.c.b16 %v956, %v955
    %v972 = vpack.c.b16 %v958, %v957
    %v973 = vpack.c.b16 %v960, %v959
    %v974 = vpack.c.b16 %v962, %v961
    %v975 = vpack.c.b16 %v964, %v963
    %v976 = vpack.c.b16 %v966, %v965
    %v977 = vpack.c.b16 %v968, %v967
    %v978 = vpack.c.b16 %v970, %v969
    %987 = vmatprep.subr.bf16.mxu0 0
    %988 = vmatpush1.bf16.msra.mxu0 %v978
    %989 = vmatprep.subr.bf16.mxu0 0
    %990 = vmatpush1.bf16.msra.mxu0 %v977
    %991 = vmatprep.subr.bf16.mxu0 0
    %992 = vmatpush1.bf16.msra.mxu0 %v976
    %993 = vmatprep.subr.bf16.mxu0 0
    %994 = vmatpush1.bf16.msra.mxu0 %v975
    %995 = vmatprep.subr.bf16.mxu0 0
    %996 = vmatpush1.bf16.msra.mxu0 %v974
    %997 = vmatprep.subr.bf16.mxu0 0
    %998 = vmatpush1.bf16.msra.mxu0 %v973
    %999 = vmatprep.subr.bf16.mxu0 0
    %1000 = vmatpush1.bf16.msra.mxu0 %v972
    %1001 = vmatprep.subr.bf16.mxu0 0
    %1002 = vmatpush1.bf16.msra.mxu0 %v971
    %1003 = vmatprep.subr.bf16.mxu0 0
    %1004 = vmatpush2.bf16.msra.mxu0 0
    %1005 = vmatprep.subr.bf16.mxu0 0
    %1006 = vmatpush2.bf16.msra.mxu0 0
    %1007 = vmatprep.subr.bf16.mxu0 0
    %1008 = vmatpush2.bf16.msra.mxu0 0
    %1009 = vmatprep.subr.bf16.mxu0 0
    %1010 = vmatpush2.bf16.msra.mxu0 0
    %1011 = vmatprep.subr.bf16.mxu0 0
    %1012 = vmatpush2.bf16.msra.mxu0 0
    %1013 = vmatprep.subr.bf16.mxu0 0
    %1014 = vmatpush2.bf16.msra.mxu0 0
    %1015 = vmatprep.subr.bf16.mxu0 0
    %1016 = vmatpush2.bf16.msra.mxu0 0
    %1017 = vmatprep.subr.bf16.mxu0 0
    %1018 = vmatpush2.bf16.msra.mxu0 0
    %1019 = vmatprep.mubr.bf16.mxu0 0
    %1020 = vmatmul.mubr.bf16.gmra.mxu0 %v918
    %v1021 = vpop.f32.mrf.mxu0
    %v1022 = vadd.f32 %v938, %v1021
    %v1023 = vpop.f32.mrf.mxu0
    %v1024 = vpop.f32.mrf.mxu0
    %v1025 = vpop.f32.mrf.mxu0
    %1026 = vdwg.mxu0
    %v1027 = vmax.f32 %v1022, 0.0
    %v1028 = vpack.c.bf16 %v1027, %v1027
    %v1029 = vld [vmem:[#allocation5 + $0x2c] sm:$0xf]
    %v1030 = vld [vmem:[#allocation5 + $0x80] sm:$0xf]
    %v1031 = vld [vmem:[#allocation5 + $0xd4] sm:$0xf]
    %v1032 = vld [vmem:[#allocation5 + $0x128] sm:$0xf]
    %v1033 = vld [vmem:[#allocation5 + $0x17c] sm:$0xf]
    %v1034 = vld [vmem:[#allocation5 + $0x1d0] sm:$0xf]
    %v1035 = vld [vmem:[#allocation5 + $0x224] sm:$0xf]
    %v1036 = vld [vmem:[#allocation5 + $0x278] sm:$0xf]
    %v1037 = vld [vmem:[#allocation5 + $0x2cc] sm:$0xf]
    %v1038 = vld [vmem:[#allocation5 + $0x320] sm:$0xf]
    %v1039 = vld [vmem:[#allocation5 + $0x374] sm:$0xf]
    %v1040 = vld [vmem:[#allocation5 + $0x3c8] sm:$0xf]
    %v1041 = vld [vmem:[#allocation5 + $0x41c] sm:$0xf]
    %v1042 = vld [vmem:[#allocation5 + $0x470] sm:$0xf]
    %v1043 = vld [vmem:[#allocation5 + $0x4c4] sm:$0xf]
    %v1044 = vld [vmem:[#allocation5 + $0x518] sm:$0xf]
    %v1045 = vlaneseq
    %v1046 = vshrl.u32 %v1045, 7
    %v1047 = vsub.s32 4, %v1046
    %v1048 = vrot.slane %v55, %v1047
    %v1065 = vunpack.c.l.b16 %v1029
    %v1066 = vunpack.c.l.b16 %v1030
    %v1067 = vunpack.c.l.b16 %v1031
    %v1068 = vunpack.c.l.b16 %v1032
    %v1069 = vunpack.c.l.b16 %v1033
    %v1070 = vunpack.c.l.b16 %v1034
    %v1071 = vunpack.c.l.b16 %v1035
    %v1072 = vunpack.c.l.b16 %v1036
    %v1073 = vunpack.c.l.b16 %v1037
    %v1074 = vunpack.c.l.b16 %v1038
    %v1075 = vunpack.c.l.b16 %v1039
    %v1076 = vunpack.c.l.b16 %v1040
    %v1077 = vunpack.c.l.b16 %v1041
    %v1078 = vunpack.c.l.b16 %v1042
    %v1079 = vunpack.c.l.b16 %v1043
    %v1080 = vunpack.c.l.b16 %v1044
    %v1081 = vpack.c.b16 %v1066, %v1065
    %v1082 = vpack.c.b16 %v1068, %v1067
    %v1083 = vpack.c.b16 %v1070, %v1069
    %v1084 = vpack.c.b16 %v1072, %v1071
    %v1085 = vpack.c.b16 %v1074, %v1073
    %v1086 = vpack.c.b16 %v1076, %v1075
    %v1087 = vpack.c.b16 %v1078, %v1077
    %v1088 = vpack.c.b16 %v1080, %v1079
    %1097 = vmatprep.subr.bf16.mxu0 0
    %1098 = vmatpush1.bf16.msra.mxu0 %v1088
    %1099 = vmatprep.subr.bf16.mxu0 0
    %1100 = vmatpush1.bf16.msra.mxu0 %v1087
    %1101 = vmatprep.subr.bf16.mxu0 0
    %1102 = vmatpush1.bf16.msra.mxu0 %v1086
    %1103 = vmatprep.subr.bf16.mxu0 0
    %1104 = vmatpush1.bf16.msra.mxu0 %v1085
    %1105 = vmatprep.subr.bf16.mxu0 0
    %1106 = vmatpush1.bf16.msra.mxu0 %v1084
    %1107 = vmatprep.subr.bf16.mxu0 0
    %1108 = vmatpush1.bf16.msra.mxu0 %v1083
    %1109 = vmatprep.subr.bf16.mxu0 0
    %1110 = vmatpush1.bf16.msra.mxu0 %v1082
    %1111 = vmatprep.subr.bf16.mxu0 0
    %1112 = vmatpush1.bf16.msra.mxu0 %v1081
    %1113 = vmatprep.subr.bf16.mxu0 0
    %1114 = vmatpush2.bf16.msra.mxu0 0
    %1115 = vmatprep.subr.bf16.mxu0 0
    %1116 = vmatpush2.bf16.msra.mxu0 0
    %1117 = vmatprep.subr.bf16.mxu0 0
    %1118 = vmatpush2.bf16.msra.mxu0 0
    %1119 = vmatprep.subr.bf16.mxu0 0
    %1120 = vmatpush2.bf16.msra.mxu0 0
    %1121 = vmatprep.subr.bf16.mxu0 0
    %1122 = vmatpush2.bf16.msra.mxu0 0
    %1123 = vmatprep.subr.bf16.mxu0 0
    %1124 = vmatpush2.bf16.msra.mxu0 0
    %1125 = vmatprep.subr.bf16.mxu0 0
    %1126 = vmatpush2.bf16.msra.mxu0 0
    %1127 = vmatprep.subr.bf16.mxu0 0
    %1128 = vmatpush2.bf16.msra.mxu0 0
    %1129 = vmatprep.mubr.bf16.mxu0 0
    %1130 = vmatmul.mubr.bf16.gmra.mxu0 %v1028
    %v1131 = vpop.f32.mrf.mxu0
    %v1132 = vadd.f32 %v1048, %v1131
    %v1133 = vpop.f32.mrf.mxu0
    %v1134 = vpop.f32.mrf.mxu0
    %v1135 = vpop.f32.mrf.mxu0
    %1136 = vdwg.mxu0
    %v1137 = vadd.f32 %v1132, %v917
    %v1138 = vmax.f32 %v1137, 0.0
    %v1139 = vpack.c.bf16 %v1138, %v1138
    %v1140 = vld [vmem:[#allocation5 + $0x30] sm:$0xff]
    %v1141 = vld [vmem:[#allocation5 + $0x84] sm:$0xff]
    %v1142 = vld [vmem:[#allocation5 + $0xd8] sm:$0xff]
    %v1143 = vld [vmem:[#allocation5 + $0x12c] sm:$0xff]
    %v1144 = vld [vmem:[#allocation5 + $0x180] sm:$0xff]
    %v1145 = vld [vmem:[#allocation5 + $0x1d4] sm:$0xff]
    %v1146 = vld [vmem:[#allocation5 + $0x228] sm:$0xff]
    %v1147 = vld [vmem:[#allocation5 + $0x27c] sm:$0xff]
    %v1148 = vld [vmem:[#allocation5 + $0x2d0] sm:$0xff]
    %v1149 = vld [vmem:[#allocation5 + $0x324] sm:$0xff]
    %v1150 = vld [vmem:[#allocation5 + $0x378] sm:$0xff]
    %v1151 = vld [vmem:[#allocation5 + $0x3cc] sm:$0xff]
    %v1152 = vld [vmem:[#allocation5 + $0x420] sm:$0xff]
    %v1153 = vld [vmem:[#allocation5 + $0x474] sm:$0xff]
    %v1154 = vld [vmem:[#allocation5 + $0x4c8] sm:$0xff]
    %v1155 = vld [vmem:[#allocation5 + $0x51c] sm:$0xff]
    %v1172 = vunpack.c.l.b16 %v1140
    %v1173 = vunpack.c.h.b16 %v1140
    %v1174 = vunpack.c.l.b16 %v1141
    %v1175 = vunpack.c.h.b16 %v1141
    %v1176 = vunpack.c.l.b16 %v1142
    %v1177 = vunpack.c.h.b16 %v1142
    %v1178 = vunpack.c.l.b16 %v1143
    %v1179 = vunpack.c.h.b16 %v1143
    %v1180 = vunpack.c.l.b16 %v1144
    %v1181 = vunpack.c.h.b16 %v1144
    %v1182 = vunpack.c.l.b16 %v1145
    %v1183 = vunpack.c.h.b16 %v1145
    %v1184 = vunpack.c.l.b16 %v1146
    %v1185 = vunpack.c.h.b16 %v1146
    %v1186 = vunpack.c.l.b16 %v1147
    %v1187 = vunpack.c.h.b16 %v1147
    %v1188 = vunpack.c.l.b16 %v1148
    %v1189 = vunpack.c.h.b16 %v1148
    %v1190 = vunpack.c.l.b16 %v1149
    %v1191 = vunpack.c.h.b16 %v1149
    %v1192 = vunpack.c.l.b16 %v1150
    %v1193 = vunpack.c.h.b16 %v1150
    %v1194 = vunpack.c.l.b16 %v1151
    %v1195 = vunpack.c.h.b16 %v1151
    %v1196 = vunpack.c.l.b16 %v1152
    %v1197 = vunpack.c.h.b16 %v1152
    %v1198 = vunpack.c.l.b16 %v1153
    %v1199 = vunpack.c.h.b16 %v1153
    %v1200 = vunpack.c.l.b16 %v1154
    %v1201 = vunpack.c.h.b16 %v1154
    %v1202 = vunpack.c.l.b16 %v1155
    %v1203 = vunpack.c.h.b16 %v1155
    %v1204 = vpack.c.b16 %v1174, %v1172
    %v1205 = vpack.c.b16 %v1175, %v1173
    %v1206 = vpack.c.b16 %v1178, %v1176
    %v1207 = vpack.c.b16 %v1179, %v1177
    %v1208 = vpack.c.b16 %v1182, %v1180
    %v1209 = vpack.c.b16 %v1183, %v1181
    %v1210 = vpack.c.b16 %v1186, %v1184
    %v1211 = vpack.c.b16 %v1187, %v1185
    %v1212 = vpack.c.b16 %v1190, %v1188
    %v1213 = vpack.c.b16 %v1191, %v1189
    %v1214 = vpack.c.b16 %v1194, %v1192
    %v1215 = vpack.c.b16 %v1195, %v1193
    %v1216 = vpack.c.b16 %v1198, %v1196
    %v1217 = vpack.c.b16 %v1199, %v1197
    %v1218 = vpack.c.b16 %v1202, %v1200
    %v1219 = vpack.c.b16 %v1203, %v1201
    %1236 = vmatprep.subr.bf16.mxu0 %v1219
    %1237 = vmatpush1.bf16.msra.mxu0 %v1218
    %1238 = vmatprep.subr.bf16.mxu0 %v1217
    %1239 = vmatpush1.bf16.msra.mxu0 %v1216
    %1240 = vmatprep.subr.bf16.mxu0 %v1215
    %1241 = vmatpush1.bf16.msra.mxu0 %v1214
    %1242 = vmatprep.subr.bf16.mxu0 %v1213
    %1243 = vmatpush1.bf16.msra.mxu0 %v1212
    %1244 = vmatprep.subr.bf16.mxu0 %v1211
    %1245 = vmatpush1.bf16.msra.mxu0 %v1210
    %1246 = vmatprep.subr.bf16.mxu0 %v1209
    %1247 = vmatpush1.bf16.msra.mxu0 %v1208
    %1248 = vmatprep.subr.bf16.mxu0 %v1207
    %1249 = vmatpush1.bf16.msra.mxu0 %v1206
    %1250 = vmatprep.subr.bf16.mxu0 %v1205
    %1251 = vmatpush1.bf16.msra.mxu0 %v1204
    %1252 = vmatprep.subr.bf16.mxu0 0
    %1253 = vmatpush2.bf16.msra.mxu0 0
    %1254 = vmatprep.subr.bf16.mxu0 0
    %1255 = vmatpush2.bf16.msra.mxu0 0
    %1256 = vmatprep.subr.bf16.mxu0 0
    %1257 = vmatpush2.bf16.msra.mxu0 0
    %1258 = vmatprep.subr.bf16.mxu0 0
    %1259 = vmatpush2.bf16.msra.mxu0 0
    %1260 = vmatprep.subr.bf16.mxu0 0
    %1261 = vmatpush2.bf16.msra.mxu0 0
    %1262 = vmatprep.subr.bf16.mxu0 0
    %1263 = vmatpush2.bf16.msra.mxu0 0
    %1264 = vmatprep.subr.bf16.mxu0 0
    %1265 = vmatpush2.bf16.msra.mxu0 0
    %1266 = vmatprep.subr.bf16.mxu0 0
    %1267 = vmatpush2.bf16.msra.mxu0 0
    %1268 = vmatprep.mubr.bf16.mxu0 0
    %1269 = vmatmul.mubr.bf16.gmra.mxu0 %v1139
    %v1270 = vpop.f32.mrf.mxu0
    %v1271 = vadd.f32 0.0, %v1270
    %v1272 = vpop.f32.mrf.mxu0
    %v1273 = vadd.f32 0.0, %v1272
    %v1274 = vpop.f32.mrf.mxu0
    %v1275 = vpop.f32.mrf.mxu0
    %1276 = vdwg.mxu0
    %v1277 = vlaneseq
    %v1278 = vshrl.u32 %v1277, 7
    %v1279 = vsub.s32 5, %v1278
    %v1280 = vrot.slane %v55, %v1279
    %v1281 = vadd.f32 %v1271, %v1280
    %v1282 = vmax.f32 %v1281, 0.0
    %v1283 = vlaneseq
    %v1284 = vshrl.u32 %v1283, 7
    %v1285 = vsub.s32 6, %v1284
    %v1286 = vrot.slane %v55, %v1285
    %v1287 = vadd.f32 %v1273, %v1286
    %v1288 = vpack.c.bf16 %v1282, %v1282
    %v1289 = vld [vmem:[#allocation5 + $0x38] sm:$0xf]
    %v1290 = vld [vmem:[#allocation5 + $0x8c] sm:$0xf]
    %v1291 = vld [vmem:[#allocation5 + $0xe0] sm:$0xf]
    %v1292 = vld [vmem:[#allocation5 + $0x134] sm:$0xf]
    %v1293 = vld [vmem:[#allocation5 + $0x188] sm:$0xf]
    %v1294 = vld [vmem:[#allocation5 + $0x1dc] sm:$0xf]
    %v1295 = vld [vmem:[#allocation5 + $0x230] sm:$0xf]
    %v1296 = vld [vmem:[#allocation5 + $0x284] sm:$0xf]
    %v1297 = vld [vmem:[#allocation5 + $0x2d8] sm:$0xf]
    %v1298 = vld [vmem:[#allocation5 + $0x32c] sm:$0xf]
    %v1299 = vld [vmem:[#allocation5 + $0x380] sm:$0xf]
    %v1300 = vld [vmem:[#allocation5 + $0x3d4] sm:$0xf]
    %v1301 = vld [vmem:[#allocation5 + $0x428] sm:$0xf]
    %v1302 = vld [vmem:[#allocation5 + $0x47c] sm:$0xf]
    %v1303 = vld [vmem:[#allocation5 + $0x4d0] sm:$0xf]
    %v1304 = vld [vmem:[#allocation5 + $0x524] sm:$0xf]
    %v1305 = vlaneseq
    %v1306 = vshrl.u32 %v1305, 7
    %v1307 = vsub.s32 7, %v1306
    %v1308 = vrot.slane %v55, %v1307
    %v1325 = vunpack.c.l.b16 %v1289
    %v1326 = vunpack.c.l.b16 %v1290
    %v1327 = vunpack.c.l.b16 %v1291
    %v1328 = vunpack.c.l.b16 %v1292
    %v1329 = vunpack.c.l.b16 %v1293
    %v1330 = vunpack.c.l.b16 %v1294
    %v1331 = vunpack.c.l.b16 %v1295
    %v1332 = vunpack.c.l.b16 %v1296
    %v1333 = vunpack.c.l.b16 %v1297
    %v1334 = vunpack.c.l.b16 %v1298
    %v1335 = vunpack.c.l.b16 %v1299
    %v1336 = vunpack.c.l.b16 %v1300
    %v1337 = vunpack.c.l.b16 %v1301
    %v1338 = vunpack.c.l.b16 %v1302
    %v1339 = vunpack.c.l.b16 %v1303
    %v1340 = vunpack.c.l.b16 %v1304
    %v1341 = vpack.c.b16 %v1326, %v1325
    %v1342 = vpack.c.b16 %v1328, %v1327
    %v1343 = vpack.c.b16 %v1330, %v1329
    %v1344 = vpack.c.b16 %v1332, %v1331
    %v1345 = vpack.c.b16 %v1334, %v1333
    %v1346 = vpack.c.b16 %v1336, %v1335
    %v1347 = vpack.c.b16 %v1338, %v1337
    %v1348 = vpack.c.b16 %v1340, %v1339
    %1357 = vmatprep.subr.bf16.mxu0 0
    %1358 = vmatpush1.bf16.msra.mxu0 %v1348
    %1359 = vmatprep.subr.bf16.mxu0 0
    %1360 = vmatpush1.bf16.msra.mxu0 %v1347
    %1361 = vmatprep.subr.bf16.mxu0 0
    %1362 = vmatpush1.bf16.msra.mxu0 %v1346
    %1363 = vmatprep.subr.bf16.mxu0 0
    %1364 = vmatpush1.bf16.msra.mxu0 %v1345
    %1365 = vmatprep.subr.bf16.mxu0 0
    %1366 = vmatpush1.bf16.msra.mxu0 %v1344
    %1367 = vmatprep.subr.bf16.mxu0 0
    %1368 = vmatpush1.bf16.msra.mxu0 %v1343
    %1369 = vmatprep.subr.bf16.mxu0 0
    %1370 = vmatpush1.bf16.msra.mxu0 %v1342
    %1371 = vmatprep.subr.bf16.mxu0 0
    %1372 = vmatpush1.bf16.msra.mxu0 %v1341
    %1373 = vmatprep.subr.bf16.mxu0 0
    %1374 = vmatpush2.bf16.msra.mxu0 0
    %1375 = vmatprep.subr.bf16.mxu0 0
    %1376 = vmatpush2.bf16.msra.mxu0 0
    %1377 = vmatprep.subr.bf16.mxu0 0
    %1378 = vmatpush2.bf16.msra.mxu0 0
    %1379 = vmatprep.subr.bf16.mxu0 0
    %1380 = vmatpush2.bf16.msra.mxu0 0
    %1381 = vmatprep.subr.bf16.mxu0 0
    %1382 = vmatpush2.bf16.msra.mxu0 0
    %1383 = vmatprep.subr.bf16.mxu0 0
    %1384 = vmatpush2.bf16.msra.mxu0 0
    %1385 = vmatprep.subr.bf16.mxu0 0
    %1386 = vmatpush2.bf16.msra.mxu0 0
    %1387 = vmatprep.subr.bf16.mxu0 0
    %1388 = vmatpush2.bf16.msra.mxu0 0
    %1389 = vmatprep.mubr.bf16.mxu0 0
    %1390 = vmatmul.mubr.bf16.gmra.mxu0 %v1288
    %v1391 = vpop.f32.mrf.mxu0
    %v1392 = vadd.f32 %v1308, %v1391
    %v1393 = vpop.f32.mrf.mxu0
    %v1394 = vpop.f32.mrf.mxu0
    %v1395 = vpop.f32.mrf.mxu0
    %1396 = vdwg.mxu0
    %v1397 = vadd.f32 %v1392, %v1287
    %v1398 = vmax.f32 %v1397, 0.0
    %v1399 = vpack.c.bf16 %v1398, %v1398
    %v1400 = vld [vmem:[#allocation5 + $0x3c] sm:$0xf]
    %v1401 = vld [vmem:[#allocation5 + $0x90] sm:$0xf]
    %v1402 = vld [vmem:[#allocation5 + $0xe4] sm:$0xf]
    %v1403 = vld [vmem:[#allocation5 + $0x138] sm:$0xf]
    %v1404 = vld [vmem:[#allocation5 + $0x18c] sm:$0xf]
    %v1405 = vld [vmem:[#allocation5 + $0x1e0] sm:$0xf]
    %v1406 = vld [vmem:[#allocation5 + $0x234] sm:$0xf]
    %v1407 = vld [vmem:[#allocation5 + $0x288] sm:$0xf]
    %v1408 = vld [vmem:[#allocation5 + $0x2dc] sm:$0xf]
    %v1409 = vld [vmem:[#allocation5 + $0x330] sm:$0xf]
    %v1410 = vld [vmem:[#allocation5 + $0x384] sm:$0xf]
    %v1411 = vld [vmem:[#allocation5 + $0x3d8] sm:$0xf]
    %v1412 = vld [vmem:[#allocation5 + $0x42c] sm:$0xf]
    %v1413 = vld [vmem:[#allocation5 + $0x480] sm:$0xf]
    %v1414 = vld [vmem:[#allocation5 + $0x4d4] sm:$0xf]
    %v1415 = vld [vmem:[#allocation5 + $0x528] sm:$0xf]
    %v1416 = vlaneseq
    %v1417 = vshrl.u32 %v1416, 7
    %v1418 = vsub.s32 0, %v1417
    %v1419 = vrot.slane %v56, %v1418
    %v1436 = vunpack.c.l.b16 %v1400
    %v1437 = vunpack.c.l.b16 %v1401
    %v1438 = vunpack.c.l.b16 %v1402
    %v1439 = vunpack.c.l.b16 %v1403
    %v1440 = vunpack.c.l.b16 %v1404
    %v1441 = vunpack.c.l.b16 %v1405
    %v1442 = vunpack.c.l.b16 %v1406
    %v1443 = vunpack.c.l.b16 %v1407
    %v1444 = vunpack.c.l.b16 %v1408
    %v1445 = vunpack.c.l.b16 %v1409
    %v1446 = vunpack.c.l.b16 %v1410
    %v1447 = vunpack.c.l.b16 %v1411
    %v1448 = vunpack.c.l.b16 %v1412
    %v1449 = vunpack.c.l.b16 %v1413
    %v1450 = vunpack.c.l.b16 %v1414
    %v1451 = vunpack.c.l.b16 %v1415
    %v1452 = vpack.c.b16 %v1437, %v1436
    %v1453 = vpack.c.b16 %v1439, %v1438
    %v1454 = vpack.c.b16 %v1441, %v1440
    %v1455 = vpack.c.b16 %v1443, %v1442
    %v1456 = vpack.c.b16 %v1445, %v1444
    %v1457 = vpack.c.b16 %v1447, %v1446
    %v1458 = vpack.c.b16 %v1449, %v1448
    %v1459 = vpack.c.b16 %v1451, %v1450
    %1468 = vmatprep.subr.bf16.mxu0 0
    %1469 = vmatpush1.bf16.msra.mxu0 %v1459
    %1470 = vmatprep.subr.bf16.mxu0 0
    %1471 = vmatpush1.bf16.msra.mxu0 %v1458
    %1472 = vmatprep.subr.bf16.mxu0 0
    %1473 = vmatpush1.bf16.msra.mxu0 %v1457
    %1474 = vmatprep.subr.bf16.mxu0 0
    %1475 = vmatpush1.bf16.msra.mxu0 %v1456
    %1476 = vmatprep.subr.bf16.mxu0 0
    %1477 = vmatpush1.bf16.msra.mxu0 %v1455
    %1478 = vmatprep.subr.bf16.mxu0 0
    %1479 = vmatpush1.bf16.msra.mxu0 %v1454
    %1480 = vmatprep.subr.bf16.mxu0 0
    %1481 = vmatpush1.bf16.msra.mxu0 %v1453
    %1482 = vmatprep.subr.bf16.mxu0 0
    %1483 = vmatpush1.bf16.msra.mxu0 %v1452
    %1484 = vmatprep.subr.bf16.mxu0 0
    %1485 = vmatpush2.bf16.msra.mxu0 0
    %1486 = vmatprep.subr.bf16.mxu0 0
    %1487 = vmatpush2.bf16.msra.mxu0 0
    %1488 = vmatprep.subr.bf16.mxu0 0
    %1489 = vmatpush2.bf16.msra.mxu0 0
    %1490 = vmatprep.subr.bf16.mxu0 0
    %1491 = vmatpush2.bf16.msra.mxu0 0
    %1492 = vmatprep.subr.bf16.mxu0 0
    %1493 = vmatpush2.bf16.msra.mxu0 0
    %1494 = vmatprep.subr.bf16.mxu0 0
    %1495 = vmatpush2.bf16.msra.mxu0 0
    %1496 = vmatprep.subr.bf16.mxu0 0
    %1497 = vmatpush2.bf16.msra.mxu0 0
    %1498 = vmatprep.subr.bf16.mxu0 0
    %1499 = vmatpush2.bf16.msra.mxu0 0
    %1500 = vmatprep.mubr.bf16.mxu0 0
    %1501 = vmatmul.mubr.bf16.gmra.mxu0 %v1399
    %v1502 = vpop.f32.mrf.mxu0
    %v1503 = vadd.f32 %v1419, %v1502
    %v1504 = vpop.f32.mrf.mxu0
    %v1505 = vpop.f32.mrf.mxu0
    %v1506 = vpop.f32.mrf.mxu0
    %1507 = vdwg.mxu0
    %v1508 = vmax.f32 %v1503, 0.0
    %v1509 = vpack.c.bf16 %v1508, %v1508
    %v1510 = vld [vmem:[#allocation5 + $0x40] sm:$0xf]
    %v1511 = vld [vmem:[#allocation5 + $0x94] sm:$0xf]
    %v1512 = vld [vmem:[#allocation5 + $0xe8] sm:$0xf]
    %v1513 = vld [vmem:[#allocation5 + $0x13c] sm:$0xf]
    %v1514 = vld [vmem:[#allocation5 + $0x190] sm:$0xf]
    %v1515 = vld [vmem:[#allocation5 + $0x1e4] sm:$0xf]
    %v1516 = vld [vmem:[#allocation5 + $0x238] sm:$0xf]
    %v1517 = vld [vmem:[#allocation5 + $0x28c] sm:$0xf]
    %v1518 = vld [vmem:[#allocation5 + $0x2e0] sm:$0xf]
    %v1519 = vld [vmem:[#allocation5 + $0x334] sm:$0xf]
    %v1520 = vld [vmem:[#allocation5 + $0x388] sm:$0xf]
    %v1521 = vld [vmem:[#allocation5 + $0x3dc] sm:$0xf]
    %v1522 = vld [vmem:[#allocation5 + $0x430] sm:$0xf]
    %v1523 = vld [vmem:[#allocation5 + $0x484] sm:$0xf]
    %v1524 = vld [vmem:[#allocation5 + $0x4d8] sm:$0xf]
    %v1525 = vld [vmem:[#allocation5 + $0x52c] sm:$0xf]
    %v1526 = vlaneseq
    %v1527 = vshrl.u32 %v1526, 7
    %v1528 = vsub.s32 1, %v1527
    %v1529 = vrot.slane %v56, %v1528
    %v1546 = vunpack.c.l.b16 %v1510
    %v1547 = vunpack.c.l.b16 %v1511
    %v1548 = vunpack.c.l.b16 %v1512
    %v1549 = vunpack.c.l.b16 %v1513
    %v1550 = vunpack.c.l.b16 %v1514
    %v1551 = vunpack.c.l.b16 %v1515
    %v1552 = vunpack.c.l.b16 %v1516
    %v1553 = vunpack.c.l.b16 %v1517
    %v1554 = vunpack.c.l.b16 %v1518
    %v1555 = vunpack.c.l.b16 %v1519
    %v1556 = vunpack.c.l.b16 %v1520
    %v1557 = vunpack.c.l.b16 %v1521
    %v1558 = vunpack.c.l.b16 %v1522
    %v1559 = vunpack.c.l.b16 %v1523
    %v1560 = vunpack.c.l.b16 %v1524
    %v1561 = vunpack.c.l.b16 %v1525
    %v1562 = vpack.c.b16 %v1547, %v1546
    %v1563 = vpack.c.b16 %v1549, %v1548
    %v1564 = vpack.c.b16 %v1551, %v1550
    %v1565 = vpack.c.b16 %v1553, %v1552
    %v1566 = vpack.c.b16 %v1555, %v1554
    %v1567 = vpack.c.b16 %v1557, %v1556
    %v1568 = vpack.c.b16 %v1559, %v1558
    %v1569 = vpack.c.b16 %v1561, %v1560
    %1578 = vmatprep.subr.bf16.mxu0 0
    %1579 = vmatpush1.bf16.msra.mxu0 %v1569
    %1580 = vmatprep.subr.bf16.mxu0 0
    %1581 = vmatpush1.bf16.msra.mxu0 %v1568
    %1582 = vmatprep.subr.bf16.mxu0 0
    %1583 = vmatpush1.bf16.msra.mxu0 %v1567
    %1584 = vmatprep.subr.bf16.mxu0 0
    %1585 = vmatpush1.bf16.msra.mxu0 %v1566
    %1586 = vmatprep.subr.bf16.mxu0 0
    %1587 = vmatpush1.bf16.msra.mxu0 %v1565
    %1588 = vmatprep.subr.bf16.mxu0 0
    %1589 = vmatpush1.bf16.msra.mxu0 %v1564
    %1590 = vmatprep.subr.bf16.mxu0 0
    %1591 = vmatpush1.bf16.msra.mxu0 %v1563
    %1592 = vmatprep.subr.bf16.mxu0 0
    %1593 = vmatpush1.bf16.msra.mxu0 %v1562
    %1594 = vmatprep.subr.bf16.mxu0 0
    %1595 = vmatpush2.bf16.msra.mxu0 0
    %1596 = vmatprep.subr.bf16.mxu0 0
    %1597 = vmatpush2.bf16.msra.mxu0 0
    %1598 = vmatprep.subr.bf16.mxu0 0
    %1599 = vmatpush2.bf16.msra.mxu0 0
    %1600 = vmatprep.subr.bf16.mxu0 0
    %1601 = vmatpush2.bf16.msra.mxu0 0
    %1602 = vmatprep.subr.bf16.mxu0 0
    %1603 = vmatpush2.bf16.msra.mxu0 0
    %1604 = vmatprep.subr.bf16.mxu0 0
    %1605 = vmatpush2.bf16.msra.mxu0 0
    %1606 = vmatprep.subr.bf16.mxu0 0
    %1607 = vmatpush2.bf16.msra.mxu0 0
    %1608 = vmatprep.subr.bf16.mxu0 0
    %1609 = vmatpush2.bf16.msra.mxu0 0
    %1610 = vmatprep.mubr.bf16.mxu0 0
    %1611 = vmatmul.mubr.bf16.gmra.mxu0 %v1509
    %v1612 = vpop.f32.mrf.mxu0
    %v1613 = vadd.f32 %v1529, %v1612
    %v1614 = vpop.f32.mrf.mxu0
    %v1615 = vpop.f32.mrf.mxu0
    %v1616 = vpop.f32.mrf.mxu0
    %1617 = vdwg.mxu0
    %v1618 = vadd.f32 %v1613, %v1398
    %v1619 = vmax.f32 %v1618, 0.0
    %v1620 = vpack.c.bf16 %v1619, %v1619
    %v1621 = vld [vmem:[#allocation5 + $0x44] sm:$0xf]
    %v1622 = vld [vmem:[#allocation5 + $0x98] sm:$0xf]
    %v1623 = vld [vmem:[#allocation5 + $0xec] sm:$0xf]
    %v1624 = vld [vmem:[#allocation5 + $0x140] sm:$0xf]
    %v1625 = vld [vmem:[#allocation5 + $0x194] sm:$0xf]
    %v1626 = vld [vmem:[#allocation5 + $0x1e8] sm:$0xf]
    %v1627 = vld [vmem:[#allocation5 + $0x23c] sm:$0xf]
    %v1628 = vld [vmem:[#allocation5 + $0x290] sm:$0xf]
    %v1629 = vld [vmem:[#allocation5 + $0x2e4] sm:$0xf]
    %v1630 = vld [vmem:[#allocation5 + $0x338] sm:$0xf]
    %v1631 = vld [vmem:[#allocation5 + $0x38c] sm:$0xf]
    %v1632 = vld [vmem:[#allocation5 + $0x3e0] sm:$0xf]
    %v1633 = vld [vmem:[#allocation5 + $0x434] sm:$0xf]
    %v1634 = vld [vmem:[#allocation5 + $0x488] sm:$0xf]
    %v1635 = vld [vmem:[#allocation5 + $0x4dc] sm:$0xf]
    %v1636 = vld [vmem:[#allocation5 + $0x530] sm:$0xf]
    %v1653 = vunpack.c.l.b16 %v1621
    %v1654 = vunpack.c.l.b16 %v1622
    %v1655 = vunpack.c.l.b16 %v1623
    %v1656 = vunpack.c.l.b16 %v1624
    %v1657 = vunpack.c.l.b16 %v1625
    %v1658 = vunpack.c.l.b16 %v1626
    %v1659 = vunpack.c.l.b16 %v1627
    %v1660 = vunpack.c.l.b16 %v1628
    %v1661 = vunpack.c.l.b16 %v1629
    %v1662 = vunpack.c.l.b16 %v1630
    %v1663 = vunpack.c.l.b16 %v1631
    %v1664 = vunpack.c.l.b16 %v1632
    %v1665 = vunpack.c.l.b16 %v1633
    %v1666 = vunpack.c.l.b16 %v1634
    %v1667 = vunpack.c.l.b16 %v1635
    %v1668 = vunpack.c.l.b16 %v1636
    %v1669 = vpack.c.b16 %v1654, %v1653
    %v1670 = vpack.c.b16 %v1656, %v1655
    %v1671 = vpack.c.b16 %v1658, %v1657
    %v1672 = vpack.c.b16 %v1660, %v1659
    %v1673 = vpack.c.b16 %v1662, %v1661
    %v1674 = vpack.c.b16 %v1664, %v1663
    %v1675 = vpack.c.b16 %v1666, %v1665
    %v1676 = vpack.c.b16 %v1668, %v1667
    %1685 = vmatprep.subr.bf16.mxu0 0
    %1686 = vmatpush1.bf16.msra.mxu0 %v1676
    %1687 = vmatprep.subr.bf16.mxu0 0
    %1688 = vmatpush1.bf16.msra.mxu0 %v1675
    %1689 = vmatprep.subr.bf16.mxu0 0
    %1690 = vmatpush1.bf16.msra.mxu0 %v1674
    %1691 = vmatprep.subr.bf16.mxu0 0
    %1692 = vmatpush1.bf16.msra.mxu0 %v1673
    %1693 = vmatprep.subr.bf16.mxu0 0
    %1694 = vmatpush1.bf16.msra.mxu0 %v1672
    %1695 = vmatprep.subr.bf16.mxu0 0
    %1696 = vmatpush1.bf16.msra.mxu0 %v1671
    %1697 = vmatprep.subr.bf16.mxu0 0
    %1698 = vmatpush1.bf16.msra.mxu0 %v1670
    %1699 = vmatprep.subr.bf16.mxu0 0
    %1700 = vmatpush1.bf16.msra.mxu0 %v1669
    %1701 = vmatprep.subr.bf16.mxu0 0
    %1702 = vmatpush2.bf16.msra.mxu0 0
    %1703 = vmatprep.subr.bf16.mxu0 0
    %1704 = vmatpush2.bf16.msra.mxu0 0
    %1705 = vmatprep.subr.bf16.mxu0 0
    %1706 = vmatpush2.bf16.msra.mxu0 0
    %1707 = vmatprep.subr.bf16.mxu0 0
    %1708 = vmatpush2.bf16.msra.mxu0 0
    %1709 = vmatprep.subr.bf16.mxu0 0
    %1710 = vmatpush2.bf16.msra.mxu0 0
    %1711 = vmatprep.subr.bf16.mxu0 0
    %1712 = vmatpush2.bf16.msra.mxu0 0
    %1713 = vmatprep.subr.bf16.mxu0 0
    %1714 = vmatpush2.bf16.msra.mxu0 0
    %1715 = vmatprep.subr.bf16.mxu0 0
    %1716 = vmatpush2.bf16.msra.mxu0 0
    %1717 = vmatprep.mubr.bf16.mxu0 0
    %1718 = vmatmul.mubr.bf16.gmra.mxu0 %v1620
    %v1719 = vpop.f32.mrf.mxu0
    %v1720 = vadd.f32 0.0, %v1719
    %v1721 = vpop.f32.mrf.mxu0
    %v1722 = vpop.f32.mrf.mxu0
    %v1723 = vpop.f32.mrf.mxu0
    %1724 = vdwg.mxu0
    %v1725 = vlaneseq
    %v1726 = vshrl.u32 %v1725, 7
    %v1727 = vsub.s32 2, %v1726
    %v1728 = vrot.slane %v56, %v1727
    %v1729 = vadd.f32 %v327, %v1728
    %v1730 = vpack.c.bf16 %v329, %v329
    %v1731 = vld [vmem:[#allocation5 + $0x48] sm:$0xf]
    %v1732 = vld [vmem:[#allocation5 + $0x9c] sm:$0xf]
    %v1733 = vld [vmem:[#allocation5 + $0xf0] sm:$0xf]
    %v1734 = vld [vmem:[#allocation5 + $0x144] sm:$0xf]
    %v1735 = vld [vmem:[#allocation5 + $0x198] sm:$0xf]
    %v1736 = vld [vmem:[#allocation5 + $0x1ec] sm:$0xf]
    %v1737 = vld [vmem:[#allocation5 + $0x240] sm:$0xf]
    %v1738 = vld [vmem:[#allocation5 + $0x294] sm:$0xf]
    %v1739 = vld [vmem:[#allocation5 + $0x2e8] sm:$0xf]
    %v1740 = vld [vmem:[#allocation5 + $0x33c] sm:$0xf]
    %v1741 = vld [vmem:[#allocation5 + $0x390] sm:$0xf]
    %v1742 = vld [vmem:[#allocation5 + $0x3e4] sm:$0xf]
    %v1743 = vld [vmem:[#allocation5 + $0x438] sm:$0xf]
    %v1744 = vld [vmem:[#allocation5 + $0x48c] sm:$0xf]
    %v1745 = vld [vmem:[#allocation5 + $0x4e0] sm:$0xf]
    %v1746 = vld [vmem:[#allocation5 + $0x534] sm:$0xf]
    %v1763 = vunpack.c.l.b16 %v1731
    %v1764 = vunpack.c.l.b16 %v1732
    %v1765 = vunpack.c.l.b16 %v1733
    %v1766 = vunpack.c.l.b16 %v1734
    %v1767 = vunpack.c.l.b16 %v1735
    %v1768 = vunpack.c.l.b16 %v1736
    %v1769 = vunpack.c.l.b16 %v1737
    %v1770 = vunpack.c.l.b16 %v1738
    %v1771 = vunpack.c.l.b16 %v1739
    %v1772 = vunpack.c.l.b16 %v1740
    %v1773 = vunpack.c.l.b16 %v1741
    %v1774 = vunpack.c.l.b16 %v1742
    %v1775 = vunpack.c.l.b16 %v1743
    %v1776 = vunpack.c.l.b16 %v1744
    %v1777 = vunpack.c.l.b16 %v1745
    %v1778 = vunpack.c.l.b16 %v1746
    %v1779 = vpack.c.b16 %v1764, %v1763
    %v1780 = vpack.c.b16 %v1766, %v1765
    %v1781 = vpack.c.b16 %v1768, %v1767
    %v1782 = vpack.c.b16 %v1770, %v1769
    %v1783 = vpack.c.b16 %v1772, %v1771
    %v1784 = vpack.c.b16 %v1774, %v1773
    %v1785 = vpack.c.b16 %v1776, %v1775
    %v1786 = vpack.c.b16 %v1778, %v1777
    %1795 = vmatprep.subr.bf16.mxu0 0
    %1796 = vmatpush1.bf16.msra.mxu0 %v1786
    %1797 = vmatprep.subr.bf16.mxu0 0
    %1798 = vmatpush1.bf16.msra.mxu0 %v1785
    %1799 = vmatprep.subr.bf16.mxu0 0
    %1800 = vmatpush1.bf16.msra.mxu0 %v1784
    %1801 = vmatprep.subr.bf16.mxu0 0
    %1802 = vmatpush1.bf16.msra.mxu0 %v1783
    %1803 = vmatprep.subr.bf16.mxu0 0
    %1804 = vmatpush1.bf16.msra.mxu0 %v1782
    %1805 = vmatprep.subr.bf16.mxu0 0
    %1806 = vmatpush1.bf16.msra.mxu0 %v1781
    %1807 = vmatprep.subr.bf16.mxu0 0
    %1808 = vmatpush1.bf16.msra.mxu0 %v1780
    %1809 = vmatprep.subr.bf16.mxu0 0
    %1810 = vmatpush1.bf16.msra.mxu0 %v1779
    %1811 = vmatprep.subr.bf16.mxu0 0
    %1812 = vmatpush2.bf16.msra.mxu0 0
    %1813 = vmatprep.subr.bf16.mxu0 0
    %1814 = vmatpush2.bf16.msra.mxu0 0
    %1815 = vmatprep.subr.bf16.mxu0 0
    %1816 = vmatpush2.bf16.msra.mxu0 0
    %1817 = vmatprep.subr.bf16.mxu0 0
    %1818 = vmatpush2.bf16.msra.mxu0 0
    %1819 = vmatprep.subr.bf16.mxu0 0
    %1820 = vmatpush2.bf16.msra.mxu0 0
    %1821 = vmatprep.subr.bf16.mxu0 0
    %1822 = vmatpush2.bf16.msra.mxu0 0
    %1823 = vmatprep.subr.bf16.mxu0 0
    %1824 = vmatpush2.bf16.msra.mxu0 0
    %1825 = vmatprep.subr.bf16.mxu0 0
    %1826 = vmatpush2.bf16.msra.mxu0 0
    %1827 = vmatprep.mubr.bf16.mxu0 0
    %1828 = vmatmul.mubr.bf16.gmra.mxu0 %v1730
    %v1829 = vpop.f32.mrf.mxu0
    %v1830 = vadd.f32 0.0, %v1829
    %v1831 = vpop.f32.mrf.mxu0
    %v1832 = vpop.f32.mrf.mxu0
    %v1833 = vpop.f32.mrf.mxu0
    %1834 = vdwg.mxu0
    %v1835 = vmul.f32 %v1830, 3.5
    %v1836 = vadd.f32 %v1729, %v1835
    %v1837 = vpack.c.bf16 %v1836, %v1836
    %v1838 = vld [vmem:[#allocation5 + $0x4c] sm:$0xf]
    %v1839 = vld [vmem:[#allocation5 + $0xa0] sm:$0xf]
    %v1840 = vld [vmem:[#allocation5 + $0xf4] sm:$0xf]
    %v1841 = vld [vmem:[#allocation5 + $0x148] sm:$0xf]
    %v1842 = vld [vmem:[#allocation5 + $0x19c] sm:$0xf]
    %v1843 = vld [vmem:[#allocation5 + $0x1f0] sm:$0xf]
    %v1844 = vld [vmem:[#allocation5 + $0x244] sm:$0xf]
    %v1845 = vld [vmem:[#allocation5 + $0x298] sm:$0xf]
    %v1846 = vld [vmem:[#allocation5 + $0x2ec] sm:$0xf]
    %v1847 = vld [vmem:[#allocation5 + $0x340] sm:$0xf]
    %v1848 = vld [vmem:[#allocation5 + $0x394] sm:$0xf]
    %v1849 = vld [vmem:[#allocation5 + $0x3e8] sm:$0xf]
    %v1850 = vld [vmem:[#allocation5 + $0x43c] sm:$0xf]
    %v1851 = vld [vmem:[#allocation5 + $0x490] sm:$0xf]
    %v1852 = vld [vmem:[#allocation5 + $0x4e4] sm:$0xf]
    %v1853 = vld [vmem:[#allocation5 + $0x538] sm:$0xf]
    %v1854 = vlaneseq
    %v1855 = vshrl.u32 %v1854, 7
    %v1856 = vsub.s32 3, %v1855
    %v1857 = vrot.slane %v56, %v1856
    %v1874 = vunpack.c.l.b16 %v1838
    %v1875 = vunpack.c.l.b16 %v1839
    %v1876 = vunpack.c.l.b16 %v1840
    %v1877 = vunpack.c.l.b16 %v1841
    %v1878 = vunpack.c.l.b16 %v1842
    %v1879 = vunpack.c.l.b16 %v1843
    %v1880 = vunpack.c.l.b16 %v1844
    %v1881 = vunpack.c.l.b16 %v1845
    %v1882 = vunpack.c.l.b16 %v1846
    %v1883 = vunpack.c.l.b16 %v1847
    %v1884 = vunpack.c.l.b16 %v1848
    %v1885 = vunpack.c.l.b16 %v1849
    %v1886 = vunpack.c.l.b16 %v1850
    %v1887 = vunpack.c.l.b16 %v1851
    %v1888 = vunpack.c.l.b16 %v1852
    %v1889 = vunpack.c.l.b16 %v1853
    %v1890 = vpack.c.b16 %v1875, %v1874
    %v1891 = vpack.c.b16 %v1877, %v1876
    %v1892 = vpack.c.b16 %v1879, %v1878
    %v1893 = vpack.c.b16 %v1881, %v1880
    %v1894 = vpack.c.b16 %v1883, %v1882
    %v1895 = vpack.c.b16 %v1885, %v1884
    %v1896 = vpack.c.b16 %v1887, %v1886
    %v1897 = vpack.c.b16 %v1889, %v1888
    %1906 = vmatprep.subr.bf16.mxu0 0
    %1907 = vmatpush1.bf16.msra.mxu0 %v1897
    %1908 = vmatprep.subr.bf16.mxu0 0
    %1909 = vmatpush1.bf16.msra.mxu0 %v1896
    %1910 = vmatprep.subr.bf16.mxu0 0
    %1911 = vmatpush1.bf16.msra.mxu0 %v1895
    %1912 = vmatprep.subr.bf16.mxu0 0
    %1913 = vmatpush1.bf16.msra.mxu0 %v1894
    %1914 = vmatprep.subr.bf16.mxu0 0
    %1915 = vmatpush1.bf16.msra.mxu0 %v1893
    %1916 = vmatprep.subr.bf16.mxu0 0
    %1917 = vmatpush1.bf16.msra.mxu0 %v1892
    %1918 = vmatprep.subr.bf16.mxu0 0
    %1919 = vmatpush1.bf16.msra.mxu0 %v1891
    %1920 = vmatprep.subr.bf16.mxu0 0
    %1921 = vmatpush1.bf16.msra.mxu0 %v1890
    %1922 = vmatprep.subr.bf16.mxu0 0
    %1923 = vmatpush2.bf16.msra.mxu0 0
    %1924 = vmatprep.subr.bf16.mxu0 0
    %1925 = vmatpush2.bf16.msra.mxu0 0
    %1926 = vmatprep.subr.bf16.mxu0 0
    %1927 = vmatpush2.bf16.msra.mxu0 0
    %1928 = vmatprep.subr.bf16.mxu0 0
    %1929 = vmatpush2.bf16.msra.mxu0 0
    %1930 = vmatprep.subr.bf16.mxu0 0
    %1931 = vmatpush2.bf16.msra.mxu0 0
    %1932 = vmatprep.subr.bf16.mxu0 0
    %1933 = vmatpush2.bf16.msra.mxu0 0
    %1934 = vmatprep.subr.bf16.mxu0 0
    %1935 = vmatpush2.bf16.msra.mxu0 0
    %1936 = vmatprep.subr.bf16.mxu0 0
    %1937 = vmatpush2.bf16.msra.mxu0 0
    %1938 = vmatprep.mubr.bf16.mxu0 0
    %1939 = vmatmul.mubr.bf16.gmra.mxu0 %v1837
    %v1940 = vpop.f32.mrf.mxu0
    %v1941 = vadd.f32 %v1857, %v1940
    %v1942 = vpop.f32.mrf.mxu0
    %v1943 = vpop.f32.mrf.mxu0
    %v1944 = vpop.f32.mrf.mxu0
    %1945 = vdwg.mxu0
    %v1946 = vmax.f32 %v1941, 0.0
    %v1947 = vadd.f32 %v1946, %v1720
    %v1948 = vpack.c.bf16 %v1947, %v1947
    %v1949 = vld [vmem:[#allocation5 + $0x50] sm:$0xf]
    %v1950 = vld [vmem:[#allocation5 + $0xa4] sm:$0xf]
    %v1951 = vld [vmem:[#allocation5 + $0xf8] sm:$0xf]
    %v1952 = vld [vmem:[#allocation5 + $0x14c] sm:$0xf]
    %v1953 = vld [vmem:[#allocation5 + $0x1a0] sm:$0xf]
    %v1954 = vld [vmem:[#allocation5 + $0x1f4] sm:$0xf]
    %v1955 = vld [vmem:[#allocation5 + $0x248] sm:$0xf]
    %v1956 = vld [vmem:[#allocation5 + $0x29c] sm:$0xf]
    %v1957 = vld [vmem:[#allocation5 + $0x2f0] sm:$0xf]
    %v1958 = vld [vmem:[#allocation5 + $0x344] sm:$0xf]
    %v1959 = vld [vmem:[#allocation5 + $0x398] sm:$0xf]
    %v1960 = vld [vmem:[#allocation5 + $0x3ec] sm:$0xf]
    %v1961 = vld [vmem:[#allocation5 + $0x440] sm:$0xf]
    %v1962 = vld [vmem:[#allocation5 + $0x494] sm:$0xf]
    %v1963 = vld [vmem:[#allocation5 + $0x4e8] sm:$0xf]
    %v1964 = vld [vmem:[#allocation5 + $0x53c] sm:$0xf]
    %v1965 = vlaneseq
    %v1966 = vshrl.u32 %v1965, 7
    %v1967 = vsub.s32 4, %v1966
    %v1968 = vrot.slane %v56, %v1967
    %v1985 = vunpack.c.l.b16 %v1949
    %v1986 = vunpack.c.l.b16 %v1950
    %v1987 = vunpack.c.l.b16 %v1951
    %v1988 = vunpack.c.l.b16 %v1952
    %v1989 = vunpack.c.l.b16 %v1953
    %v1990 = vunpack.c.l.b16 %v1954
    %v1991 = vunpack.c.l.b16 %v1955
    %v1992 = vunpack.c.l.b16 %v1956
    %v1993 = vunpack.c.l.b16 %v1957
    %v1994 = vunpack.c.l.b16 %v1958
    %v1995 = vunpack.c.l.b16 %v1959
    %v1996 = vunpack.c.l.b16 %v1960
    %v1997 = vunpack.c.l.b16 %v1961
    %v1998 = vunpack.c.l.b16 %v1962
    %v1999 = vunpack.c.l.b16 %v1963
    %v2000 = vunpack.c.l.b16 %v1964
    %v2001 = vpack.c.b16 %v1986, %v1985
    %v2002 = vpack.c.b16 %v1988, %v1987
    %v2003 = vpack.c.b16 %v1990, %v1989
    %v2004 = vpack.c.b16 %v1992, %v1991
    %v2005 = vpack.c.b16 %v1994, %v1993
    %v2006 = vpack.c.b16 %v1996, %v1995
    %v2007 = vpack.c.b16 %v1998, %v1997
    %v2008 = vpack.c.b16 %v2000, %v1999
    %2017 = vmatprep.subr.bf16.mxu0 0
    %2018 = vmatpush1.bf16.msra.mxu0 %v2008
    %2019 = vmatprep.subr.bf16.mxu0 0
    %2020 = vmatpush1.bf16.msra.mxu0 %v2007
    %2021 = vmatprep.subr.bf16.mxu0 0
    %2022 = vmatpush1.bf16.msra.mxu0 %v2006
    %2023 = vmatprep.subr.bf16.mxu0 0
    %2024 = vmatpush1.bf16.msra.mxu0 %v2005
    %2025 = vmatprep.subr.bf16.mxu0 0
    %2026 = vmatpush1.bf16.msra.mxu0 %v2004
    %2027 = vmatprep.subr.bf16.mxu0 0
    %2028 = vmatpush1.bf16.msra.mxu0 %v2003
    %2029 = vmatprep.subr.bf16.mxu0 0
    %2030 = vmatpush1.bf16.msra.mxu0 %v2002
    %2031 = vmatprep.subr.bf16.mxu0 0
    %2032 = vmatpush1.bf16.msra.mxu0 %v2001
    %2033 = vmatprep.subr.bf16.mxu0 0
    %2034 = vmatpush2.bf16.msra.mxu0 0
    %2035 = vmatprep.subr.bf16.mxu0 0
    %2036 = vmatpush2.bf16.msra.mxu0 0
    %2037 = vmatprep.subr.bf16.mxu0 0
    %2038 = vmatpush2.bf16.msra.mxu0 0
    %2039 = vmatprep.subr.bf16.mxu0 0
    %2040 = vmatpush2.bf16.msra.mxu0 0
    %2041 = vmatprep.subr.bf16.mxu0 0
    %2042 = vmatpush2.bf16.msra.mxu0 0
    %2043 = vmatprep.subr.bf16.mxu0 0
    %2044 = vmatpush2.bf16.msra.mxu0 0
    %2045 = vmatprep.subr.bf16.mxu0 0
    %2046 = vmatpush2.bf16.msra.mxu0 0
    %2047 = vmatprep.subr.bf16.mxu0 0
    %2048 = vmatpush2.bf16.msra.mxu0 0
    %2049 = vmatprep.mubr.bf16.mxu0 0
    %2050 = vmatmul.mubr.bf16.gmra.mxu0 %v1948
    %v2051 = vpop.f32.mrf.mxu0
    %v2052 = vadd.f32 %v1968, %v2051
    %v2053 = vpop.f32.mrf.mxu0
    %v2054 = vpop.f32.mrf.mxu0
    %v2055 = vpop.f32.mrf.mxu0
    %2056 = vdwg.mxu0
    %2057 = vst [vmem:[#allocation8] sm:$0xff] %v2052
    // Predicated region
    $region26: #{tpu_custom_call.1} parent=1 // pred_check
      _
    $region27: #{tpu_custom_call.1} parent=1 // pred_check_branch
      %2059 = sbr.rel (0) target = $region29
    $region28: #{tpu_custom_call.1} parent=1 // pred_region
      %s2061 = ssub.s32 128, 128
      %2062 = vsyncadd [#allocation4], %s2061
      %s2064 = sshll.u32 [#allocation8], 4
      %s2065 = int_to_ptr.vmem [resolvable:$true] %s2064
      %2067 = dma.vmem_to_hbm [thread:$0]  %s2065, 128, %s3, [#allocation4]
    $region29: #{tpu_custom_call.1} parent=1 // pred_fallthru
      _
    // Predicated region
    $region30: #{tpu_custom_call.1} parent=1 // pred_check
      _
    $region31: #{tpu_custom_call.1} parent=1 // pred_check_branch
      %2069 = sbr.rel (0) target = $region33
    $region32: #{tpu_custom_call.1} parent=1 // pred_region
      %2070 = dma.done [#allocation4], 128
    $region33: #{tpu_custom_call.1} parent=1 // pred_fallthru
      _
    %2071 = vsyncpa [#allocation3], 1
    %2072 = vsyncpa [#allocation6], 1
    %2073 = vsyncpa [#allocation4], 1

</llo_original>
